<compile_context>
chip_gen: v5e
topology: v5e:2x2
jax: 0.10.0
libtpu: 0.0.40
codegen_flags: <defaults>
</compile_context>

<pallas_src>
import functools

import numpy as np
import jax
import jax.numpy as jnp
from jax import lax
from jax.experimental import pallas as pl
from jax.experimental.pallas import tpu as pltpu

# ---- module hyper-parameters (match the PyTorch spec / defaults) ----
BATCH        = 2      # batch_size
MAX_SENT_LEN = 8      # max_sentence_len
TOKEN_LEN    = 16     # max_token_len (conv sequence length L)
VOCAB        = 64     # vocab_size
EMBED        = 32     # embedding_size (= StackedConv1d features_num)
LABELS       = 12     # labels_num
LAYERS_N     = 2      # StackedConv1d layers_n
KSIZE        = 3      # kernel_size, padding = KSIZE // 2 ("same", odd K assumed)
NEG_SLOPE    = 0.01   # nn.LeakyReLU default
# TODO(synk): nn.Dropout(p=0.0) is identity at inference; training-mode dropout not implemented.


def tagger_kernel(tok_ref, embT_ref, w_ref, b_ref, wout_ref, bout_ref, o_ref, *, token_len):
    """All B*S words packed along the lane axis (lanes = B*S*T, lane-dense).

    tok_ref : (1, lanes)            int32  char ids
    embT_ref: (C, V)                bf16   embedding table, transposed (row 0 == padding_idx is zero)
    w_ref   : (LAYERS_N, K, C, C)   f32    per-tap conv weights, w[l, k, o, i] = conv_w[l, o, i, k]
    b_ref   : (LAYERS_N, C, 1)      f32
    wout_ref: (LBL_PAD, C)          f32    head weight, rows padded to a multiple of 8
    bout_ref: (LBL_PAD, 1)          f32
    o_ref   : (LBL_PAD, lanes)      f32    per-lane logits (identical within each word segment)
    """
    f32 = jnp.float32
    C, V = embT_ref.shape
    lanes = tok_ref.shape[-1]
    layers_n, k_taps = w_ref.shape[0], w_ref.shape[1]
    pad = k_taps // 2
    T = token_len

    # ---- char embedding as a one-hot MXU matmul (bf16 operands; exact: one nonzero per column) ----
    tok = tok_ref[...]                                                 # (1, lanes) int32
    vocab_ids = lax.broadcasted_iota(jnp.int32, (V, lanes), 0)
    onehot = (vocab_ids == tok).astype(jnp.bfloat16)                   # (V, lanes)
    x = jnp.dot(embT_ref[...], onehot, preferred_element_type=f32)     # (C, lanes) f32: embeddings.T

    # ---- hoisted iota, per-tap zero-padding masks, and pooling butterfly masks ----
    col = lax.broadcasted_iota(jnp.int32, (C, lanes), 1)
    if T & (T - 1) == 0:
        col_local = jnp.bitwise_and(col, T - 1)                        # position within a word
    else:
        col_local = col % T
    tap_masks = []
    for k in range(k_taps):
        s = k - pad
        tap_masks.append((col_local + s >= 0) & (col_local + s < T))
    fly_masks = []
    step = 1
    while step < T:
        fly_masks.append((step, col_local + step < T))
        step *= 2

    # ---- residual stacked conv: K accumulating small MXU dots per layer (no im2col temp) ----
    for layer in range(layers_n):
        acc = None
        for k in range(k_taps):
            s = k - pad
            sh = x if s == 0 else pltpu.roll(x, shift=(-s) % lanes, axis=1)
            tap = jnp.where(tap_masks[k], sh, 0.0)                     # f32 (keep VPU work in f32)
            d = jnp.dot(w_ref[layer, k], tap, preferred_element_type=f32)
            acc = d if acc is None else acc + d
        y = acc + b_ref[layer]
        y = jnp.maximum(y, NEG_SLOPE * y)                              # LeakyReLU
        x = x + y

    # ---- AdaptiveMaxPool1d(1): per-word max via cyclic-roll butterfly within each T-lane segment ----
    m = x
    for step, msk in fly_masks:
        fwd = pltpu.roll(m, shift=(-step) % lanes, axis=1)             # value at lane j + step
        wrap = pltpu.roll(m, shift=(T - step) % lanes, axis=1)         # value at lane j + step - T
        m = jnp.maximum(m, jnp.where(msk, fwd, wrap))
    # every lane of a word segment now holds that word's channel-wise max

    # ---- linear head; rows padded to a sublane multiple -> unmasked full-tile store ----
    logits = jnp.dot(wout_ref[...], m, preferred_element_type=f32) + bout_ref[...]
    o_ref[...] = logits.astype(o_ref.dtype)


def prepare_params(emb, conv_w, conv_b, out_w, out_b):
    """One-time static weight re-layout (hoisted out of the per-call forward path).

    emb: (V, C); conv_w: (L, C, C, K); conv_b: (L, C); out_w: (LBL, C); out_b: (LBL,)."""
    V, C = emb.shape
    layers_n, _, _, k = conv_w.shape
    lbl = out_w.shape[0]
    lbl_pad = max(8, ((lbl + 7) // 8) * 8)                             # 12 -> 16 (two full sublane tiles)

    emb_t = jnp.asarray(emb).T.astype(jnp.bfloat16)                    # (C, V) bf16 MXU operand
    w_taps = jnp.asarray(conv_w, jnp.float32).transpose(0, 3, 1, 2)    # (L, K, C, C): w[l,k,o,i]
    b_conv = jnp.asarray(conv_b, jnp.float32).reshape(layers_n, C, 1)
    w_out_p = jnp.zeros((lbl_pad, C), jnp.float32).at[:lbl].set(jnp.asarray(out_w, jnp.float32))
    b_out_p = jnp.zeros((lbl_pad, 1), jnp.float32).at[:lbl, 0].set(jnp.asarray(out_b, jnp.float32))
    return emb_t, w_taps, b_conv, w_out_p, b_out_p


@functools.partial(jax.jit, static_argnames=("labels_num",))
def single_token_pos_tagger(tokens, emb_t, w_taps, b_conv, w_out_p, b_out_p, *, labels_num):
    """tokens: (B, S, T) int; pre-laid-out params from prepare_params.
    Returns logits (B, labels_num, S) like the PyTorch module."""
    B, S, T = tokens.shape
    C, V = emb_t.shape
    layers_n, k_taps = w_taps.shape[0], w_taps.shape[1]
    lbl_pad = w_out_p.shape[0]
    lanes = B * S * T                                                  # 256 here -> lane-dense blocks

    tokens_flat = tokens.reshape(1, lanes).astype(jnp.int32)

    out = pl.pallas_call(
        functools.partial(tagger_kernel, token_len=T),
        out_shape=jax.ShapeDtypeStruct((lbl_pad, lanes), jnp.float32),
        grid=(1,),                                                     # single step: no duplicated param DMAs
        in_specs=[
            pl.BlockSpec((1, lanes), lambda g: (0, 0)),                    # token ids
            pl.BlockSpec((C, V), lambda g: (0, 0)),                        # embedding table (bf16)
            pl.BlockSpec((layers_n, k_taps, C, C), lambda g: (0, 0, 0, 0)),  # per-tap conv weights
            pl.BlockSpec((layers_n, C, 1), lambda g: (0, 0, 0)),           # conv biases
            pl.BlockSpec((lbl_pad, C), lambda g: (0, 0)),                  # head weight (row-padded)
            pl.BlockSpec((lbl_pad, 1), lambda g: (0, 0)),                  # head bias   (row-padded)
        ],
        out_specs=pl.BlockSpec((lbl_pad, lanes), lambda g: (0, 0)),
        compiler_params=pltpu.CompilerParams(dimension_semantics=("arbitrary",)),
    )(tokens_flat, emb_t, w_taps, b_conv, w_out_p, b_out_p)

    # One lane per word (all lanes of a word segment carry identical logits); drop padded label rows.
    logits_flat = out[:labels_num, ::T]                                # (LBL, B*S)
    return logits_flat.reshape(labels_num, B, S).transpose(1, 0, 2)    # (B, labels_num, S)


def reference_forward(tokens, emb, conv_w, conv_b, out_w, out_b):
    """Pure-JAX reference matching SingleTokenPOSTagger.forward exactly."""
    B, S, T = tokens.shape
    layers_n = conv_w.shape[0]
    pad = conv_w.shape[-1] // 2
    x = emb[tokens.reshape(B * S, T)]                     # (N, T, C) char embeddings
    x = jnp.transpose(x, (0, 2, 1))                       # (N, C, T)
    out = x
    for l in range(layers_n):
        y = lax.conv_general_dilated(out, conv_w[l], window_strides=(1,), padding=[(pad, pad)],
                                     dimension_numbers=("NCH", "OIH", "NCH"))
        y = y + conv_b[l][None, :, None]
        y = jnp.where(y > 0, y, NEG_SLOPE * y)            # LeakyReLU
        out = out + y
    pooled = out.max(axis=-1)                             # AdaptiveMaxPool1d(1) + squeeze
    logits_flat = pooled @ out_w.T + out_b                # Linear
    return logits_flat.reshape(B, S, -1).transpose(0, 2, 1)   # (B, labels_num, S)


if __name__ == "__main__":
    key = jax.random.PRNGKey(0)
    k_tok, k_len, k_emb, k_w, k_b, k_ow, k_ob = jax.random.split(key, 7)

    B, S, T = BATCH, MAX_SENT_LEN, TOKEN_LEN
    V, C, LBL = VOCAB, EMBED, LABELS

    # tokens: random char ids, zero-padded to each word's length (0 == padding_idx)
    raw = jax.random.randint(k_tok, (B, S, T), 1, V, dtype=jnp.int32)
    lens = jax.random.randint(k_len, (B, S, 1), 3, T + 1, dtype=jnp.int32)
    pos = jnp.arange(T, dtype=jnp.int32)[None, None, :]
    tokens = jnp.where(pos < lens, raw, 0)

    # parameters (PyTorch-default-style init); embedding row 0 zeroed (padding_idx=0).
    emb = (0.1 * jax.random.normal(k_emb, (V, C), dtype=jnp.float32))
    emb = emb.astype(jnp.bfloat16).astype(jnp.float32)    # bf16-representable -> bf16 one-hot matmul is exact
    emb = emb.at[0].set(0.0)

    bound_c = 1.0 / np.sqrt(C * KSIZE)
    conv_w = jax.random.uniform(k_w, (LAYERS_N, C, C, KSIZE),
                                minval=-bound_c, maxval=bound_c, dtype=jnp.float32)
    conv_b = jax.random.uniform(k_b, (LAYERS_N, C),
                                minval=-bound_c, maxval=bound_c, dtype=jnp.float32)

    bound_o = 1.0 / np.sqrt(C)
    out_w = jax.random.uniform(k_ow, (LBL, C), minval=-bound_o, maxval=bound_o, dtype=jnp.float32)
    out_b = jax.random.uniform(k_ob, (LBL,), minval=-bound_o, maxval=bound_o, dtype=jnp.float32)

    # One-time layout prep (hoisted out of the forward path), then the fully-jitted forward.
    params = prepare_params(emb, conv_w, conv_b, out_w, out_b)
    logits = jax.block_until_ready(
        single_token_pos_tagger(tokens, *params, labels_num=LBL))
    ref = jax.block_until_ready(reference_forward(tokens, emb, conv_w, conv_b, out_w, out_b))

    assert logits.shape == (B, LBL, S), logits.shape
    np.testing.assert_allclose(np.asarray(logits), np.asarray(ref), rtol=1e-4, atol=1e-4)

    print("KERNEL_OK")
</pallas_src>

<mosaic_0001>
module attributes {stable_mosaic.version = 11 : i64} {
  func.func @tagger_kernel(%arg0: i32, %arg1: memref<1x256xi32, #tpu.memory_space<vmem>>, %arg2: memref<32x64xbf16, #tpu.memory_space<vmem>>, %arg3: memref<2x3x32x32xf32, #tpu.memory_space<vmem>>, %arg4: memref<2x32x1xf32, #tpu.memory_space<vmem>>, %arg5: memref<16x32xf32, #tpu.memory_space<vmem>>, %arg6: memref<16x1xf32, #tpu.memory_space<vmem>>, %arg7: memref<16x256xf32, #tpu.memory_space<vmem>>) attributes {dimension_semantics = [#tpu.dimension_semantics<arbitrary>], iteration_bounds = array<i64: 1>, scalar_prefetch = 0 : i64, scratch_operands = 0 : i64, tpu.core_type = #tpu.core_type<tc>, window_params = [{pipeline_mode = #tpu.pipeline_mode<synchronous>, transform_indices = @transform_0, window_bounds = array<i64: 1, 256>}, {pipeline_mode = #tpu.pipeline_mode<synchronous>, transform_indices = @transform_1, window_bounds = array<i64: 32, 64>}, {pipeline_mode = #tpu.pipeline_mode<synchronous>, transform_indices = @transform_2, window_bounds = array<i64: 2, 3, 32, 32>}, {pipeline_mode = #tpu.pipeline_mode<synchronous>, transform_indices = @transform_3, window_bounds = array<i64: 2, 32, 1>}, {pipeline_mode = #tpu.pipeline_mode<synchronous>, transform_indices = @transform_4, window_bounds = array<i64: 16, 32>}, {pipeline_mode = #tpu.pipeline_mode<synchronous>, transform_indices = @transform_5, window_bounds = array<i64: 16, 1>}, {pipeline_mode = #tpu.pipeline_mode<synchronous>, transform_indices = @transform_6, window_bounds = array<i64: 16, 256>}]} {
    %c0 = arith.constant 0 : index
    %c0_0 = arith.constant 0 : index
    %0 = vector.load %arg1[%c0, %c0_0] : memref<1x256xi32, #tpu.memory_space<vmem>>, vector<1x256xi32>
    %1 = tpu.iota {dimensions = array<i32: 0>} : vector<64x256xi32>
    %2 = vector.broadcast %0 : vector<1x256xi32> to vector<64x256xi32>
    %3 = arith.cmpi eq, %1, %2 : vector<64x256xi32>
    %4 = arith.extui %3 : vector<64x256xi1> to vector<64x256xi32>
    %5 = arith.sitofp %4 : vector<64x256xi32> to vector<64x256xf32>
    %6 = arith.truncf %5 : vector<64x256xf32> to vector<64x256xbf16>
    %c0_1 = arith.constant 0 : index
    %c0_2 = arith.constant 0 : index
    %7 = vector.load %arg2[%c0_1, %c0_2] : memref<32x64xbf16, #tpu.memory_space<vmem>>, vector<32x64xbf16>
    %cst = arith.constant dense<0.000000e+00> : vector<32x256xf32>
    %8 = tpu.matmul %7, %6, %cst {dimension_numbers = #tpu.dot_dimension_numbers<[1], [0], [0], [1], [0, 0, 1, 1], [], []>} : vector<32x64xbf16>, vector<64x256xbf16>, vector<32x256xf32> -> vector<32x256xf32>
    %9 = tpu.iota {dimensions = array<i32: 1>} : vector<32x256xi32>
    %c15_i32 = arith.constant 15 : i32
    %10 = vector.broadcast %c15_i32 : i32 to vector<32x256xi32>
    %11 = arith.andi %9, %10 : vector<32x256xi32>
    %c-1_i32 = arith.constant -1 : i32
    %12 = vector.broadcast %c-1_i32 : i32 to vector<32x256xi32>
    %13 = arith.addi %11, %12 : vector<32x256xi32>
    %c0_i32 = arith.constant 0 : i32
    %14 = vector.broadcast %c0_i32 : i32 to vector<32x256xi32>
    %15 = arith.cmpi sge, %13, %14 : vector<32x256xi32>
    %c-1_i32_3 = arith.constant -1 : i32
    %16 = vector.broadcast %c-1_i32_3 : i32 to vector<32x256xi32>
    %17 = arith.addi %11, %16 : vector<32x256xi32>
    %c16_i32 = arith.constant 16 : i32
    %18 = vector.broadcast %c16_i32 : i32 to vector<32x256xi32>
    %19 = arith.cmpi slt, %17, %18 : vector<32x256xi32>
    %20 = arith.andi %15, %19 : vector<32x256xi1>
    %c0_i32_4 = arith.constant 0 : i32
    %21 = vector.broadcast %c0_i32_4 : i32 to vector<32x256xi32>
    %22 = arith.addi %11, %21 : vector<32x256xi32>
    %c0_i32_5 = arith.constant 0 : i32
    %23 = vector.broadcast %c0_i32_5 : i32 to vector<32x256xi32>
    %24 = arith.cmpi sge, %22, %23 : vector<32x256xi32>
    %c0_i32_6 = arith.constant 0 : i32
    %25 = vector.broadcast %c0_i32_6 : i32 to vector<32x256xi32>
    %26 = arith.addi %11, %25 : vector<32x256xi32>
    %c16_i32_7 = arith.constant 16 : i32
    %27 = vector.broadcast %c16_i32_7 : i32 to vector<32x256xi32>
    %28 = arith.cmpi slt, %26, %27 : vector<32x256xi32>
    %29 = arith.andi %24, %28 : vector<32x256xi1>
    %c1_i32 = arith.constant 1 : i32
    %30 = vector.broadcast %c1_i32 : i32 to vector<32x256xi32>
    %31 = arith.addi %11, %30 : vector<32x256xi32>
    %c0_i32_8 = arith.constant 0 : i32
    %32 = vector.broadcast %c0_i32_8 : i32 to vector<32x256xi32>
    %33 = arith.cmpi sge, %31, %32 : vector<32x256xi32>
    %c1_i32_9 = arith.constant 1 : i32
    %34 = vector.broadcast %c1_i32_9 : i32 to vector<32x256xi32>
    %35 = arith.addi %11, %34 : vector<32x256xi32>
    %c16_i32_10 = arith.constant 16 : i32
    %36 = vector.broadcast %c16_i32_10 : i32 to vector<32x256xi32>
    %37 = arith.cmpi slt, %35, %36 : vector<32x256xi32>
    %38 = arith.andi %33, %37 : vector<32x256xi1>
    %c1_i32_11 = arith.constant 1 : i32
    %39 = vector.broadcast %c1_i32_11 : i32 to vector<32x256xi32>
    %40 = arith.addi %11, %39 : vector<32x256xi32>
    %c16_i32_12 = arith.constant 16 : i32
    %41 = vector.broadcast %c16_i32_12 : i32 to vector<32x256xi32>
    %42 = arith.cmpi slt, %40, %41 : vector<32x256xi32>
    %c2_i32 = arith.constant 2 : i32
    %43 = vector.broadcast %c2_i32 : i32 to vector<32x256xi32>
    %44 = arith.addi %11, %43 : vector<32x256xi32>
    %c16_i32_13 = arith.constant 16 : i32
    %45 = vector.broadcast %c16_i32_13 : i32 to vector<32x256xi32>
    %46 = arith.cmpi slt, %44, %45 : vector<32x256xi32>
    %c4_i32 = arith.constant 4 : i32
    %47 = vector.broadcast %c4_i32 : i32 to vector<32x256xi32>
    %48 = arith.addi %11, %47 : vector<32x256xi32>
    %c16_i32_14 = arith.constant 16 : i32
    %49 = vector.broadcast %c16_i32_14 : i32 to vector<32x256xi32>
    %50 = arith.cmpi slt, %48, %49 : vector<32x256xi32>
    %c8_i32 = arith.constant 8 : i32
    %51 = vector.broadcast %c8_i32 : i32 to vector<32x256xi32>
    %52 = arith.addi %11, %51 : vector<32x256xi32>
    %c16_i32_15 = arith.constant 16 : i32
    %53 = vector.broadcast %c16_i32_15 : i32 to vector<32x256xi32>
    %54 = arith.cmpi slt, %52, %53 : vector<32x256xi32>
    %c1_i32_16 = arith.constant 1 : i32
    %55 = tpu.dynamic_rotate %8 by %c1_i32_16 dim 1 : vector<32x256xf32>, i32 -> vector<32x256xf32>
    %cst_17 = arith.constant 0.000000e+00 : f32
    %56 = vector.broadcast %cst_17 : f32 to vector<32x256xf32>
    %57 = arith.select %20, %55, %56 : vector<32x256xi1>, vector<32x256xf32>
    %c0_18 = arith.constant 0 : index
    %c0_19 = arith.constant 0 : index
    %c0_20 = arith.constant 0 : index
    %c0_21 = arith.constant 0 : index
    %58 = vector.load %arg3[%c0_18, %c0_19, %c0_20, %c0_21] : memref<2x3x32x32xf32, #tpu.memory_space<vmem>>, vector<1x1x32x32xf32>
    %59 = vector.shape_cast %58 : vector<1x1x32x32xf32> to vector<32x32xf32>
    %cst_22 = arith.constant dense<0.000000e+00> : vector<32x256xf32>
    %60 = tpu.matmul %59, %57, %cst_22 {dimension_numbers = #tpu.dot_dimension_numbers<[1], [0], [0], [1], [0, 0, 1, 1], [], []>} : vector<32x32xf32>, vector<32x256xf32>, vector<32x256xf32> -> vector<32x256xf32>
    %cst_23 = arith.constant 0.000000e+00 : f32
    %61 = vector.broadcast %cst_23 : f32 to vector<32x256xf32>
    %62 = arith.select %29, %8, %61 : vector<32x256xi1>, vector<32x256xf32>
    %c0_24 = arith.constant 0 : index
    %c1 = arith.constant 1 : index
    %c0_25 = arith.constant 0 : index
    %c0_26 = arith.constant 0 : index
    %63 = vector.load %arg3[%c0_24, %c1, %c0_25, %c0_26] : memref<2x3x32x32xf32, #tpu.memory_space<vmem>>, vector<1x1x32x32xf32>
    %64 = vector.shape_cast %63 : vector<1x1x32x32xf32> to vector<32x32xf32>
    %cst_27 = arith.constant dense<0.000000e+00> : vector<32x256xf32>
    %65 = tpu.matmul %64, %62, %cst_27 {dimension_numbers = #tpu.dot_dimension_numbers<[1], [0], [0], [1], [0, 0, 1, 1], [], []>} : vector<32x32xf32>, vector<32x256xf32>, vector<32x256xf32> -> vector<32x256xf32>
    %66 = arith.addf %60, %65 : vector<32x256xf32>
    %c255_i32 = arith.constant 255 : i32
    %67 = tpu.dynamic_rotate %8 by %c255_i32 dim 1 : vector<32x256xf32>, i32 -> vector<32x256xf32>
    %cst_28 = arith.constant 0.000000e+00 : f32
    %68 = vector.broadcast %cst_28 : f32 to vector<32x256xf32>
    %69 = arith.select %38, %67, %68 : vector<32x256xi1>, vector<32x256xf32>
    %c0_29 = arith.constant 0 : index
    %c2 = arith.constant 2 : index
    %c0_30 = arith.constant 0 : index
    %c0_31 = arith.constant 0 : index
    %70 = vector.load %arg3[%c0_29, %c2, %c0_30, %c0_31] : memref<2x3x32x32xf32, #tpu.memory_space<vmem>>, vector<1x1x32x32xf32>
    %71 = vector.shape_cast %70 : vector<1x1x32x32xf32> to vector<32x32xf32>
    %cst_32 = arith.constant dense<0.000000e+00> : vector<32x256xf32>
    %72 = tpu.matmul %71, %69, %cst_32 {dimension_numbers = #tpu.dot_dimension_numbers<[1], [0], [0], [1], [0, 0, 1, 1], [], []>} : vector<32x32xf32>, vector<32x256xf32>, vector<32x256xf32> -> vector<32x256xf32>
    %73 = arith.addf %66, %72 : vector<32x256xf32>
    %c0_33 = arith.constant 0 : index
    %c0_34 = arith.constant 0 : index
    %c0_35 = arith.constant 0 : index
    %74 = vector.load %arg4[%c0_33, %c0_34, %c0_35] : memref<2x32x1xf32, #tpu.memory_space<vmem>>, vector<1x32x1xf32>
    %75 = vector.shape_cast %74 : vector<1x32x1xf32> to vector<32x1xf32>
    %76 = vector.broadcast %75 : vector<32x1xf32> to vector<32x256xf32>
    %77 = arith.addf %73, %76 : vector<32x256xf32>
    %cst_36 = arith.constant 0.00999999977 : f32
    %78 = vector.broadcast %cst_36 : f32 to vector<32x256xf32>
    %79 = arith.mulf %78, %77 : vector<32x256xf32>
    %80 = arith.maximumf %77, %79 : vector<32x256xf32>
    %81 = arith.addf %8, %80 : vector<32x256xf32>
    %c1_i32_37 = arith.constant 1 : i32
    %82 = tpu.dynamic_rotate %81 by %c1_i32_37 dim 1 : vector<32x256xf32>, i32 -> vector<32x256xf32>
    %cst_38 = arith.constant 0.000000e+00 : f32
    %83 = vector.broadcast %cst_38 : f32 to vector<32x256xf32>
    %84 = arith.select %20, %82, %83 : vector<32x256xi1>, vector<32x256xf32>
    %c1_39 = arith.constant 1 : index
    %c0_40 = arith.constant 0 : index
    %c0_41 = arith.constant 0 : index
    %c0_42 = arith.constant 0 : index
    %85 = vector.load %arg3[%c1_39, %c0_40, %c0_41, %c0_42] : memref<2x3x32x32xf32, #tpu.memory_space<vmem>>, vector<1x1x32x32xf32>
    %86 = vector.shape_cast %85 : vector<1x1x32x32xf32> to vector<32x32xf32>
    %cst_43 = arith.constant dense<0.000000e+00> : vector<32x256xf32>
    %87 = tpu.matmul %86, %84, %cst_43 {dimension_numbers = #tpu.dot_dimension_numbers<[1], [0], [0], [1], [0, 0, 1, 1], [], []>} : vector<32x32xf32>, vector<32x256xf32>, vector<32x256xf32> -> vector<32x256xf32>
    %cst_44 = arith.constant 0.000000e+00 : f32
    %88 = vector.broadcast %cst_44 : f32 to vector<32x256xf32>
    %89 = arith.select %29, %81, %88 : vector<32x256xi1>, vector<32x256xf32>
    %c1_45 = arith.constant 1 : index
    %c1_46 = arith.constant 1 : index
    %c0_47 = arith.constant 0 : index
    %c0_48 = arith.constant 0 : index
    %90 = vector.load %arg3[%c1_45, %c1_46, %c0_47, %c0_48] : memref<2x3x32x32xf32, #tpu.memory_space<vmem>>, vector<1x1x32x32xf32>
    %91 = vector.shape_cast %90 : vector<1x1x32x32xf32> to vector<32x32xf32>
    %cst_49 = arith.constant dense<0.000000e+00> : vector<32x256xf32>
    %92 = tpu.matmul %91, %89, %cst_49 {dimension_numbers = #tpu.dot_dimension_numbers<[1], [0], [0], [1], [0, 0, 1, 1], [], []>} : vector<32x32xf32>, vector<32x256xf32>, vector<32x256xf32> -> vector<32x256xf32>
    %93 = arith.addf %87, %92 : vector<32x256xf32>
    %c255_i32_50 = arith.constant 255 : i32
    %94 = tpu.dynamic_rotate %81 by %c255_i32_50 dim 1 : vector<32x256xf32>, i32 -> vector<32x256xf32>
    %cst_51 = arith.constant 0.000000e+00 : f32
    %95 = vector.broadcast %cst_51 : f32 to vector<32x256xf32>
    %96 = arith.select %38, %94, %95 : vector<32x256xi1>, vector<32x256xf32>
    %c1_52 = arith.constant 1 : index
    %c2_53 = arith.constant 2 : index
    %c0_54 = arith.constant 0 : index
    %c0_55 = arith.constant 0 : index
    %97 = vector.load %arg3[%c1_52, %c2_53, %c0_54, %c0_55] : memref<2x3x32x32xf32, #tpu.memory_space<vmem>>, vector<1x1x32x32xf32>
    %98 = vector.shape_cast %97 : vector<1x1x32x32xf32> to vector<32x32xf32>
    %cst_56 = arith.constant dense<0.000000e+00> : vector<32x256xf32>
    %99 = tpu.matmul %98, %96, %cst_56 {dimension_numbers = #tpu.dot_dimension_numbers<[1], [0], [0], [1], [0, 0, 1, 1], [], []>} : vector<32x32xf32>, vector<32x256xf32>, vector<32x256xf32> -> vector<32x256xf32>
    %100 = arith.addf %93, %99 : vector<32x256xf32>
    %c1_57 = arith.constant 1 : index
    %c0_58 = arith.constant 0 : index
    %c0_59 = arith.constant 0 : index
    %101 = vector.load %arg4[%c1_57, %c0_58, %c0_59] : memref<2x32x1xf32, #tpu.memory_space<vmem>>, vector<1x32x1xf32>
    %102 = vector.shape_cast %101 : vector<1x32x1xf32> to vector<32x1xf32>
    %103 = vector.broadcast %102 : vector<32x1xf32> to vector<32x256xf32>
    %104 = arith.addf %100, %103 : vector<32x256xf32>
    %cst_60 = arith.constant 0.00999999977 : f32
    %105 = vector.broadcast %cst_60 : f32 to vector<32x256xf32>
    %106 = arith.mulf %105, %104 : vector<32x256xf32>
    %107 = arith.maximumf %104, %106 : vector<32x256xf32>
    %108 = arith.addf %81, %107 : vector<32x256xf32>
    %c255_i32_61 = arith.constant 255 : i32
    %109 = tpu.dynamic_rotate %108 by %c255_i32_61 dim 1 : vector<32x256xf32>, i32 -> vector<32x256xf32>
    %c15_i32_62 = arith.constant 15 : i32
    %110 = tpu.dynamic_rotate %108 by %c15_i32_62 dim 1 : vector<32x256xf32>, i32 -> vector<32x256xf32>
    %111 = arith.select %42, %109, %110 : vector<32x256xi1>, vector<32x256xf32>
    %112 = arith.maximumf %108, %111 : vector<32x256xf32>
    %c254_i32 = arith.constant 254 : i32
    %113 = tpu.dynamic_rotate %112 by %c254_i32 dim 1 : vector<32x256xf32>, i32 -> vector<32x256xf32>
    %c14_i32 = arith.constant 14 : i32
    %114 = tpu.dynamic_rotate %112 by %c14_i32 dim 1 : vector<32x256xf32>, i32 -> vector<32x256xf32>
    %115 = arith.select %46, %113, %114 : vector<32x256xi1>, vector<32x256xf32>
    %116 = arith.maximumf %112, %115 : vector<32x256xf32>
    %c252_i32 = arith.constant 252 : i32
    %117 = tpu.dynamic_rotate %116 by %c252_i32 dim 1 : vector<32x256xf32>, i32 -> vector<32x256xf32>
    %c12_i32 = arith.constant 12 : i32
    %118 = tpu.dynamic_rotate %116 by %c12_i32 dim 1 : vector<32x256xf32>, i32 -> vector<32x256xf32>
    %119 = arith.select %50, %117, %118 : vector<32x256xi1>, vector<32x256xf32>
    %120 = arith.maximumf %116, %119 : vector<32x256xf32>
    %c248_i32 = arith.constant 248 : i32
    %121 = tpu.dynamic_rotate %120 by %c248_i32 dim 1 : vector<32x256xf32>, i32 -> vector<32x256xf32>
    %c8_i32_63 = arith.constant 8 : i32
    %122 = tpu.dynamic_rotate %120 by %c8_i32_63 dim 1 : vector<32x256xf32>, i32 -> vector<32x256xf32>
    %123 = arith.select %54, %121, %122 : vector<32x256xi1>, vector<32x256xf32>
    %124 = arith.maximumf %120, %123 : vector<32x256xf32>
    %c0_64 = arith.constant 0 : index
    %c0_65 = arith.constant 0 : index
    %125 = vector.load %arg5[%c0_64, %c0_65] : memref<16x32xf32, #tpu.memory_space<vmem>>, vector<16x32xf32>
    %cst_66 = arith.constant dense<0.000000e+00> : vector<16x256xf32>
    %126 = tpu.matmul %125, %124, %cst_66 {dimension_numbers = #tpu.dot_dimension_numbers<[1], [0], [0], [1], [0, 0, 1, 1], [], []>} : vector<16x32xf32>, vector<32x256xf32>, vector<16x256xf32> -> vector<16x256xf32>
    %c0_67 = arith.constant 0 : index
    %c0_68 = arith.constant 0 : index
    %127 = vector.load %arg6[%c0_67, %c0_68] : memref<16x1xf32, #tpu.memory_space<vmem>>, vector<16x1xf32>
    %128 = vector.broadcast %127 : vector<16x1xf32> to vector<16x256xf32>
    %129 = arith.addf %126, %128 : vector<16x256xf32>
    %c0_69 = arith.constant 0 : index
    %c0_70 = arith.constant 0 : index
    %130 = vector.load %arg7[%c0_69, %c0_70] : memref<16x256xf32, #tpu.memory_space<vmem>>, vector<16x256xf32>
    tpu.vector_store %arg7[%c0_69, %c0_70], %129 {strides = array<i32>} : memref<16x256xf32, #tpu.memory_space<vmem>>, vector<16x256xf32>,
    return
  }
  func.func @transform_0(%arg0: i32) -> (i32, i32) {
    %c0_i32 = arith.constant 0 : i32
    %c0_i32_0 = arith.constant 0 : i32
    %c0_i32_1 = arith.constant 0 : i32
    return %c0_i32, %c0_i32_0 : i32, i32
  }
  func.func @transform_1(%arg0: i32) -> (i32, i32) {
    %c0_i32 = arith.constant 0 : i32
    %c0_i32_0 = arith.constant 0 : i32
    %c0_i32_1 = arith.constant 0 : i32
    return %c0_i32, %c0_i32_0 : i32, i32
  }
  func.func @transform_2(%arg0: i32) -> (i32, i32, i32, i32) {
    %c0_i32 = arith.constant 0 : i32
    %c0_i32_0 = arith.constant 0 : i32
    %c0_i32_1 = arith.constant 0 : i32
    %c0_i32_2 = arith.constant 0 : i32
    %c0_i32_3 = arith.constant 0 : i32
    return %c0_i32, %c0_i32_0, %c0_i32_1, %c0_i32_2 : i32, i32, i32, i32
  }
  func.func @transform_3(%arg0: i32) -> (i32, i32, i32) {
    %c0_i32 = arith.constant 0 : i32
    %c0_i32_0 = arith.constant 0 : i32
    %c0_i32_1 = arith.constant 0 : i32
    %c0_i32_2 = arith.constant 0 : i32
    return %c0_i32, %c0_i32_0, %c0_i32_1 : i32, i32, i32
  }
  func.func @transform_4(%arg0: i32) -> (i32, i32) {
    %c0_i32 = arith.constant 0 : i32
    %c0_i32_0 = arith.constant 0 : i32
    %c0_i32_1 = arith.constant 0 : i32
    return %c0_i32, %c0_i32_0 : i32, i32
  }
  func.func @transform_5(%arg0: i32) -> (i32, i32) {
    %c0_i32 = arith.constant 0 : i32
    %c0_i32_0 = arith.constant 0 : i32
    %c0_i32_1 = arith.constant 0 : i32
    return %c0_i32, %c0_i32_0 : i32, i32
  }
  func.func @transform_6(%arg0: i32) -> (i32, i32) {
    %c0_i32 = arith.constant 0 : i32
    %c0_i32_0 = arith.constant 0 : i32
    %c0_i32_1 = arith.constant 0 : i32
    return %c0_i32, %c0_i32_0 : i32, i32
  }
}

</mosaic_0001>

<llo_original>
// kernel: single_token_pos_tagger.1
$region0: #{single_token_pos_tagger.1}
  #allocation0 [shape = 'u32[]', space=smem, size = 0x4, offset = 0x4, fixed_abs, tag = 'smem constant byte address 0x4 - core index']
  #allocation1 [shape = 'u32[72,128]{1,0:T(1,128)}', space=vmem, size = 0x9000, scoped, tag = 'internal scratch']
  %s0 = inlined_call_operand.vmem [shape: s32[1,256], index: 0, kind: input, shape index: {}]
  %s1 = inlined_call_operand.vmem [shape: bf16[32,64], index: 1, kind: input, shape index: {}]
  %s2 = inlined_call_operand.hbm [shape: f32[2,3,32,32], index: 2, kind: input, shape index: {}]
  %s3 = inlined_call_operand.vmem [shape: f32[2,32,1], index: 3, kind: input, shape index: {}]
  %s4 = inlined_call_operand.vmem [shape: f32[16,32], index: 4, kind: input, shape index: {}]
  %s5 = inlined_call_operand.vmem [shape: f32[16,1], index: 5, kind: input, shape index: {}]
  %s6 = inlined_call_operand.vmem [shape: f32[16,256], index: 6, kind: output, shape index: {}]
  %s7 = sld [smem:[#allocation0]]
  $region38: #{single_token_pos_tagger.1} parent=0
    _
  %s9 = ssub.s32 1, %s7
  %s10 = scalar_select 0, %s9, %s7
  $region1: #{single_token_pos_tagger.1} parent=0
    #allocation2 [shape = 'u8[98304]{0}', space=vmem, size = 0x18000, scoped, tag = 'input window, operand 2, single buffered']
    #allocation3 [shape = 's32[1]{0}', space=sflag, size = 0x4, scoped, tag = 'scoped memory for single_token_pos_tagger.1']
    %11 = vsyncpa [#allocation3], 0
    // Predicated region
    $region2: #{single_token_pos_tagger.1} parent=1 // pred_check
      _
    $region3: #{single_token_pos_tagger.1} parent=1 // pred_check_branch
      %13 = sbr.rel (0) target = $region5
    $region4: #{single_token_pos_tagger.1} parent=1 // pred_region
      _
    $region5: #{single_token_pos_tagger.1} parent=1 // pred_fallthru
      _
    // Predicated region
    $region6: #{single_token_pos_tagger.1} parent=1 // pred_check
      _
    $region7: #{single_token_pos_tagger.1} parent=1 // pred_check_branch
      %15 = sbr.rel (0) target = $region9
    $region8: #{single_token_pos_tagger.1} parent=1 // pred_region
      _
    $region9: #{single_token_pos_tagger.1} parent=1 // pred_fallthru
      _
    // Predicated region
    $region10: #{single_token_pos_tagger.1} parent=1 // pred_check
      _
    $region11: #{single_token_pos_tagger.1} parent=1 // pred_check_branch
      %17 = sbr.rel (0) target = $region13
    $region12: #{single_token_pos_tagger.1} parent=1 // pred_region
      %19 = vsyncadd [#allocation3], 0
      %s20 = sshll.u32 %s2, 4
      %s21 = int_to_ptr.hbm [resolvable:$true] %s20
      %s22 = sshll.u32 [#allocation2], 4
      %s23 = int_to_ptr.vmem [resolvable:$true] %s22
      %28 = dma.hbm_to_vmem [thread:$0]  %s21, 3072, %s23, [#allocation3], 128, 128, 8
    $region13: #{single_token_pos_tagger.1} parent=1 // pred_fallthru
      _
    // Predicated region
    $region14: #{single_token_pos_tagger.1} parent=1 // pred_check
      _
    $region15: #{single_token_pos_tagger.1} parent=1 // pred_check_branch
      %30 = sbr.rel (0) target = $region17
    $region16: #{single_token_pos_tagger.1} parent=1 // pred_region
      _
    $region17: #{single_token_pos_tagger.1} parent=1 // pred_fallthru
      _
    // Predicated region
    $region18: #{single_token_pos_tagger.1} parent=1 // pred_check
      _
    $region19: #{single_token_pos_tagger.1} parent=1 // pred_check_branch
      %32 = sbr.rel (0) target = $region21
    $region20: #{single_token_pos_tagger.1} parent=1 // pred_region
      _
    $region21: #{single_token_pos_tagger.1} parent=1 // pred_fallthru
      _
    // Predicated region
    $region22: #{single_token_pos_tagger.1} parent=1 // pred_check
      _
    $region23: #{single_token_pos_tagger.1} parent=1 // pred_check_branch
      %34 = sbr.rel (0) target = $region25
    $region24: #{single_token_pos_tagger.1} parent=1 // pred_region
      _
    $region25: #{single_token_pos_tagger.1} parent=1 // pred_fallthru
      _
    // Predicated region
    $region26: #{single_token_pos_tagger.1} parent=1 // pred_check
      _
    $region27: #{single_token_pos_tagger.1} parent=1 // pred_check_branch
      %36 = sbr.rel (0) target = $region29
    $region28: #{single_token_pos_tagger.1} parent=1 // pred_region
      %38 = dma.done [#allocation3], 3072
    $region29: #{single_token_pos_tagger.1} parent=1 // pred_fallthru
      _
    %v40 = vld [vmem:[%s0] sm:$0x3]
    %v41 = vlaneseq
    %v42 = vshrl.u32 %v41, 7
    %v43 = vadd.s32 %v42, 8
    %v44 = vadd.s32 %v42, 16
    %v45 = vadd.s32 %v42, 24
    %v46 = vadd.s32 %v42, 32
    %v47 = vadd.s32 %v42, 40
    %v48 = vadd.s32 %v42, 48
    %v49 = vadd.s32 %v42, 56
    %v50 = vperm.slane %v40, 0
    %v51 = vperm.slane %v40, 1
    %vm52 = vcmp.eq.s32.totalorder %v42, %v50
    %vm53 = vcmp.eq.s32.totalorder %v42, %v51
    %vm54 = vcmp.eq.s32.totalorder %v43, %v50
    %vm55 = vcmp.eq.s32.totalorder %v43, %v51
    %vm56 = vcmp.eq.s32.totalorder %v44, %v50
    %vm57 = vcmp.eq.s32.totalorder %v44, %v51
    %vm58 = vcmp.eq.s32.totalorder %v45, %v50
    %vm59 = vcmp.eq.s32.totalorder %v45, %v51
    %vm60 = vcmp.eq.s32.totalorder %v46, %v50
    %vm61 = vcmp.eq.s32.totalorder %v46, %v51
    %vm62 = vcmp.eq.s32.totalorder %v47, %v50
    %vm63 = vcmp.eq.s32.totalorder %v47, %v51
    %vm64 = vcmp.eq.s32.totalorder %v48, %v50
    %vm65 = vcmp.eq.s32.totalorder %v48, %v51
    %vm66 = vcmp.eq.s32.totalorder %v49, %v50
    %vm67 = vcmp.eq.s32.totalorder %v49, %v51
    %v68 = vsel %vm52, 1, 0
    %v69 = vsel %vm53, 1, 0
    %v70 = vsel %vm54, 1, 0
    %v71 = vsel %vm55, 1, 0
    %v72 = vsel %vm56, 1, 0
    %v73 = vsel %vm57, 1, 0
    %v74 = vsel %vm58, 1, 0
    %v75 = vsel %vm59, 1, 0
    %v76 = vsel %vm60, 1, 0
    %v77 = vsel %vm61, 1, 0
    %v78 = vsel %vm62, 1, 0
    %v79 = vsel %vm63, 1, 0
    %v80 = vsel %vm64, 1, 0
    %v81 = vsel %vm65, 1, 0
    %v82 = vsel %vm66, 1, 0
    %v83 = vsel %vm67, 1, 0
    %v84 = vcvt.s32.f32 %v68
    %v85 = vcvt.s32.f32 %v69
    %v86 = vcvt.s32.f32 %v70
    %v87 = vcvt.s32.f32 %v71
    %v88 = vcvt.s32.f32 %v72
    %v89 = vcvt.s32.f32 %v73
    %v90 = vcvt.s32.f32 %v74
    %v91 = vcvt.s32.f32 %v75
    %v92 = vcvt.s32.f32 %v76
    %v93 = vcvt.s32.f32 %v77
    %v94 = vcvt.s32.f32 %v78
    %v95 = vcvt.s32.f32 %v79
    %v96 = vcvt.s32.f32 %v80
    %v97 = vcvt.s32.f32 %v81
    %v98 = vcvt.s32.f32 %v82
    %v99 = vcvt.s32.f32 %v83
    %v100 = vpack.c.bf16 %v86, %v84
    %v101 = vpack.c.bf16 %v87, %v85
    %v102 = vpack.c.bf16 %v90, %v88
    %v103 = vpack.c.bf16 %v91, %v89
    %v104 = vpack.c.bf16 %v94, %v92
    %v105 = vpack.c.bf16 %v95, %v93
    %v106 = vpack.c.bf16 %v98, %v96
    %v107 = vpack.c.bf16 %v99, %v97
    %v108 = vld [vmem:[%s1] sm:$0xf]
    %v109 = vld [vmem:[%s1 + $0x4] sm:$0xf]
    %v110 = vld [vmem:[%s1 + $0x8] sm:$0xf]
    %v111 = vld [vmem:[%s1 + $0xc] sm:$0xf]
    %v116 = vunpack.c.l.b16 %v108
    %v117 = vunpack.c.l.b16 %v109
    %v118 = vunpack.c.l.b16 %v110
    %v119 = vunpack.c.l.b16 %v111
    %v120 = vpack.c.b16 %v117, %v116
    %v121 = vpack.c.b16 %v119, %v118
    %vm122 = vcmask 523264
    %v124 = vsel %vm122, %v120, 0
    %v127 = vsel %vm122, %v121, 0
    %129 = vmatpush.bf16.msra.mxu0 0
    %130 = vmatpush.bf16.msra.mxu0 0
    %131 = vmatpush.bf16.msra.mxu0 0
    %132 = vmatpush.bf16.msra.mxu0 0
    %133 = vmatpush.bf16.msra.mxu0 %v106
    %134 = vmatpush.bf16.msra.mxu0 %v104
    %135 = vmatpush.bf16.msra.mxu0 %v102
    %136 = vmatpush.bf16.msra.mxu0 %v100
    %137 = vmatmul.bf16.gmra.mxu0 %v124
    %v138 = vpop.f32.mrf.mxu0
    %v139 = vadd.f32 0.0, %v138
    %v140 = vpop.f32.mrf.mxu0
    %v141 = vadd.f32 0.0, %v140
    %142 = vmatmul.bf16.gmra.mxu0 %v127
    %v143 = vpop.f32.mrf.mxu0
    %v144 = vadd.f32 0.0, %v143
    %v145 = vpop.f32.mrf.mxu0
    %v146 = vadd.f32 0.0, %v145
    %147 = vdwg.mxu0
    %148 = vmatpush.bf16.msra.mxu0 0
    %149 = vmatpush.bf16.msra.mxu0 0
    %150 = vmatpush.bf16.msra.mxu0 0
    %151 = vmatpush.bf16.msra.mxu0 0
    %152 = vmatpush.bf16.msra.mxu0 %v107
    %153 = vmatpush.bf16.msra.mxu0 %v105
    %154 = vmatpush.bf16.msra.mxu0 %v103
    %155 = vmatpush.bf16.msra.mxu0 %v101
    %156 = vmatmul.bf16.gmra.mxu0 %v124
    %v157 = vpop.f32.mrf.mxu0
    %v158 = vadd.f32 0.0, %v157
    %v159 = vpop.f32.mrf.mxu0
    %v160 = vadd.f32 0.0, %v159
    %161 = vmatmul.bf16.gmra.mxu0 %v127
    %v162 = vpop.f32.mrf.mxu0
    %v163 = vadd.f32 0.0, %v162
    %v164 = vpop.f32.mrf.mxu0
    %v165 = vadd.f32 0.0, %v164
    %166 = vdwg.mxu0
    %v167 = vlaneseq
    %v168 = vand.u32 %v167, 127
    %v169 = vadd.s32 %v168, 128
    %v170 = vand.u32 %v168, 15
    %v171 = vand.u32 %v169, 15
    %v172 = vadd.s32 %v170, 4294967295
    %v173 = vadd.s32 %v171, 4294967295
    %vm174 = vcmp.ge.s32.totalorder %v172, 0
    %vm175 = vcmp.ge.s32.totalorder %v173, 0
    %vm176 = vcmp.lt.s32.totalorder %v172, 16
    %vm177 = vcmp.lt.s32.totalorder %v173, 16
    %vm178 = vmand %vm174, %vm176
    %vm179 = vmand %vm175, %vm177
    %vm180 = vcmp.ge.s32.totalorder %v170, 0
    %vm181 = vcmp.ge.s32.totalorder %v171, 0
    %vm182 = vcmp.lt.s32.totalorder %v170, 16
    %vm183 = vcmp.lt.s32.totalorder %v171, 16
    %vm184 = vmand %vm180, %vm182
    %vm185 = vmand %vm181, %vm183
    %v186 = vadd.s32 %v170, 1
    %v187 = vadd.s32 %v171, 1
    %vm188 = vcmp.ge.s32.totalorder %v186, 0
    %vm189 = vcmp.ge.s32.totalorder %v187, 0
    %vm190 = vcmp.lt.s32.totalorder %v186, 16
    %vm191 = vcmp.lt.s32.totalorder %v187, 16
    %vm192 = vmand %vm188, %vm190
    %vm193 = vmand %vm189, %vm191
    %v194 = vadd.s32 %v170, 2
    %v195 = vadd.s32 %v171, 2
    %vm196 = vcmp.lt.s32.totalorder %v194, 16
    %vm197 = vcmp.lt.s32.totalorder %v195, 16
    %v198 = vadd.s32 %v170, 4
    %v199 = vadd.s32 %v171, 4
    %vm200 = vcmp.lt.s32.totalorder %v198, 16
    %vm201 = vcmp.lt.s32.totalorder %v199, 16
    %v202 = vadd.s32 %v170, 8
    %v203 = vadd.s32 %v171, 8
    %vm204 = vcmp.lt.s32.totalorder %v202, 16
    %vm205 = vcmp.lt.s32.totalorder %v203, 16
    %206 = vrot.lane.b32.xlu0 %v139, 1
    %v207 = vpop.permute.xlu0 %206
    %208 = vrot.lane.b32.xlu0 %v141, 1
    %v209 = vpop.permute.xlu0 %208
    %210 = vrot.lane.b32.xlu0 %v144, 1
    %v211 = vpop.permute.xlu0 %210
    %212 = vrot.lane.b32.xlu0 %v146, 1
    %v213 = vpop.permute.xlu0 %212
    %214 = vrot.lane.b32.xlu0 %v158, 1
    %v215 = vpop.permute.xlu0 %214
    %216 = vrot.lane.b32.xlu0 %v160, 1
    %v217 = vpop.permute.xlu0 %216
    %218 = vrot.lane.b32.xlu0 %v163, 1
    %v219 = vpop.permute.xlu0 %218
    %220 = vrot.lane.b32.xlu0 %v165, 1
    %v221 = vpop.permute.xlu0 %220
    %vm222 = vcmp.lt.s32.totalorder %v168, 1
    %v223 = vsel %vm222, %v207, %v215
    %v224 = vsel %vm222, %v209, %v217
    %v225 = vsel %vm222, %v211, %v219
    %v226 = vsel %vm222, %v213, %v221
    %v227 = vsel %vm222, %v215, %v207
    %v228 = vsel %vm222, %v217, %v209
    %v229 = vsel %vm222, %v219, %v211
    %v230 = vsel %vm222, %v221, %v213
    %v231 = vsel %vm178, %v227, 0.0
    %v232 = vsel %vm179, %v223, 0.0
    %v233 = vsel %vm178, %v228, 0.0
    %v234 = vsel %vm179, %v224, 0.0
    %v235 = vsel %vm178, %v229, 0.0
    %v236 = vsel %vm179, %v225, 0.0
    %v237 = vsel %vm178, %v230, 0.0
    %v238 = vsel %vm179, %v226, 0.0
    %v239 = vld [vmem:[#allocation2] sm:$0xff]
    %v240 = vld [vmem:[#allocation2 + $0x8] sm:$0xff]
    %v241 = vld [vmem:[#allocation2 + $0x10] sm:$0xff]
    %v242 = vld [vmem:[#allocation2 + $0x18] sm:$0xff]
    %v243 = vsel %vm184, %v139, 0.0
    %v244 = vsel %vm185, %v158, 0.0
    %v245 = vsel %vm184, %v141, 0.0
    %v246 = vsel %vm185, %v160, 0.0
    %v247 = vsel %vm184, %v144, 0.0
    %v248 = vsel %vm185, %v163, 0.0
    %v249 = vsel %vm184, %v146, 0.0
    %v250 = vsel %vm185, %v165, 0.0
    %s251 = scalar_lea.vmem [#allocation2], 32
    %v252 = vld [vmem:[%s251] sm:$0xff]
    %v253 = vld [vmem:[%s251 + $0x8] sm:$0xff]
    %v254 = vld [vmem:[%s251 + $0x10] sm:$0xff]
    %v255 = vld [vmem:[%s251 + $0x18] sm:$0xff]
    %vm256 = vcmask 261120
    %v258 = vsel %vm256, %v252, 0
    %v261 = vsel %vm256, %v253, 0
    %v264 = vsel %vm256, %v254, 0
    %v267 = vsel %vm256, %v255, 0
    %269 = vmatpush.msra.mxu0 0.0
    %270 = vmatpush.msra.mxu0 0.0
    %271 = vmatpush.msra.mxu0 0.0
    %272 = vmatpush.msra.mxu0 0.0
    %273 = vmatpush.msra.mxu0 0.0
    %274 = vmatpush.msra.mxu0 0.0
    %275 = vmatpush.msra.mxu0 0.0
    %276 = vmatpush.msra.mxu0 0.0
    %277 = vmatpush.msra.mxu0 0.0
    %278 = vmatpush.msra.mxu0 0.0
    %279 = vmatpush.msra.mxu0 0.0
    %280 = vmatpush.msra.mxu0 0.0
    %281 = vmatpush.msra.mxu0 %v249
    %282 = vmatpush.msra.mxu0 %v247
    %283 = vmatpush.msra.mxu0 %v245
    %284 = vmatpush.msra.mxu0 %v243
    %285 = vmatmul.f32.gmra.mxu0 %v258
    %v286 = vpop.f32.mrf.mxu0
    %v287 = vadd.f32 0.0, %v286
    %288 = vmatmul.f32.gmra.mxu0 %v261
    %v289 = vpop.f32.mrf.mxu0
    %v290 = vadd.f32 0.0, %v289
    %291 = vmatmul.f32.gmra.mxu0 %v264
    %v292 = vpop.f32.mrf.mxu0
    %v293 = vadd.f32 0.0, %v292
    %294 = vmatmul.f32.gmra.mxu0 %v267
    %v295 = vpop.f32.mrf.mxu0
    %v296 = vadd.f32 0.0, %v295
    %297 = vdwg.mxu0
    %298 = vmatpush.msra.mxu0 0.0
    %299 = vmatpush.msra.mxu0 0.0
    %300 = vmatpush.msra.mxu0 0.0
    %301 = vmatpush.msra.mxu0 0.0
    %302 = vmatpush.msra.mxu0 0.0
    %303 = vmatpush.msra.mxu0 0.0
    %304 = vmatpush.msra.mxu0 0.0
    %305 = vmatpush.msra.mxu0 0.0
    %306 = vmatpush.msra.mxu0 0.0
    %307 = vmatpush.msra.mxu0 0.0
    %308 = vmatpush.msra.mxu0 0.0
    %309 = vmatpush.msra.mxu0 0.0
    %310 = vmatpush.msra.mxu0 %v250
    %311 = vmatpush.msra.mxu0 %v248
    %312 = vmatpush.msra.mxu0 %v246
    %313 = vmatpush.msra.mxu0 %v244
    %314 = vmatmul.f32.gmra.mxu0 %v258
    %v315 = vpop.f32.mrf.mxu0
    %v316 = vadd.f32 0.0, %v315
    %317 = vmatmul.f32.gmra.mxu0 %v261
    %v318 = vpop.f32.mrf.mxu0
    %v319 = vadd.f32 0.0, %v318
    %320 = vmatmul.f32.gmra.mxu0 %v264
    %v321 = vpop.f32.mrf.mxu0
    %v322 = vadd.f32 0.0, %v321
    %323 = vmatmul.f32.gmra.mxu0 %v267
    %v324 = vpop.f32.mrf.mxu0
    %v325 = vadd.f32 0.0, %v324
    %326 = vdwg.mxu0
    %v328 = vsel %vm256, %v239, 0
    %v331 = vsel %vm256, %v240, 0
    %v334 = vsel %vm256, %v241, 0
    %v337 = vsel %vm256, %v242, 0
    %339 = vmatpush.msra.mxu0 0.0
    %340 = vmatpush.msra.mxu0 0.0
    %341 = vmatpush.msra.mxu0 0.0
    %342 = vmatpush.msra.mxu0 0.0
    %343 = vmatpush.msra.mxu0 0.0
    %344 = vmatpush.msra.mxu0 0.0
    %345 = vmatpush.msra.mxu0 0.0
    %346 = vmatpush.msra.mxu0 0.0
    %347 = vmatpush.msra.mxu0 0.0
    %348 = vmatpush.msra.mxu0 0.0
    %349 = vmatpush.msra.mxu0 0.0
    %350 = vmatpush.msra.mxu0 0.0
    %351 = vmatpush.msra.mxu0 %v237
    %352 = vmatpush.msra.mxu0 %v235
    %353 = vmatpush.msra.mxu0 %v233
    %354 = vmatpush.msra.mxu0 %v231
    %355 = vmatmul.f32.gmra.mxu0 %v328
    %v356 = vpop.f32.mrf.mxu0
    %v357 = vadd.f32 %v287, %v356
    %358 = vmatmul.f32.gmra.mxu0 %v331
    %v359 = vpop.f32.mrf.mxu0
    %v360 = vadd.f32 %v290, %v359
    %361 = vmatmul.f32.gmra.mxu0 %v334
    %v362 = vpop.f32.mrf.mxu0
    %v363 = vadd.f32 %v293, %v362
    %364 = vmatmul.f32.gmra.mxu0 %v337
    %v365 = vpop.f32.mrf.mxu0
    %v366 = vadd.f32 %v296, %v365
    %367 = vdwg.mxu0
    %368 = vmatpush.msra.mxu0 0.0
    %369 = vmatpush.msra.mxu0 0.0
    %370 = vmatpush.msra.mxu0 0.0
    %371 = vmatpush.msra.mxu0 0.0
    %372 = vmatpush.msra.mxu0 0.0
    %373 = vmatpush.msra.mxu0 0.0
    %374 = vmatpush.msra.mxu0 0.0
    %375 = vmatpush.msra.mxu0 0.0
    %376 = vmatpush.msra.mxu0 0.0
    %377 = vmatpush.msra.mxu0 0.0
    %378 = vmatpush.msra.mxu0 0.0
    %379 = vmatpush.msra.mxu0 0.0
    %380 = vmatpush.msra.mxu0 %v238
    %381 = vmatpush.msra.mxu0 %v236
    %382 = vmatpush.msra.mxu0 %v234
    %383 = vmatpush.msra.mxu0 %v232
    %384 = vmatmul.f32.gmra.mxu0 %v328
    %v385 = vpop.f32.mrf.mxu0
    %v386 = vadd.f32 %v316, %v385
    %387 = vmatmul.f32.gmra.mxu0 %v331
    %v388 = vpop.f32.mrf.mxu0
    %v389 = vadd.f32 %v319, %v388
    %390 = vmatmul.f32.gmra.mxu0 %v334
    %v391 = vpop.f32.mrf.mxu0
    %v392 = vadd.f32 %v322, %v391
    %393 = vmatmul.f32.gmra.mxu0 %v337
    %v394 = vpop.f32.mrf.mxu0
    %v395 = vadd.f32 %v325, %v394
    %396 = vdwg.mxu0
    %397 = vrot.lane.b32.xlu0 %v139, 127
    %v398 = vpop.permute.xlu0 %397
    %399 = vrot.lane.b32.xlu0 %v141, 127
    %v400 = vpop.permute.xlu0 %399
    %401 = vrot.lane.b32.xlu0 %v144, 127
    %v402 = vpop.permute.xlu0 %401
    %403 = vrot.lane.b32.xlu0 %v146, 127
    %v404 = vpop.permute.xlu0 %403
    %405 = vrot.lane.b32.xlu0 %v158, 127
    %v406 = vpop.permute.xlu0 %405
    %407 = vrot.lane.b32.xlu0 %v160, 127
    %v408 = vpop.permute.xlu0 %407
    %409 = vrot.lane.b32.xlu0 %v163, 127
    %v410 = vpop.permute.xlu0 %409
    %411 = vrot.lane.b32.xlu0 %v165, 127
    %v412 = vpop.permute.xlu0 %411
    %vm413 = vcmp.lt.s32.totalorder %v168, 127
    %v414 = vsel %vm413, %v398, %v406
    %v415 = vsel %vm413, %v400, %v408
    %v416 = vsel %vm413, %v402, %v410
    %v417 = vsel %vm413, %v404, %v412
    %v418 = vsel %vm413, %v406, %v398
    %v419 = vsel %vm413, %v408, %v400
    %v420 = vsel %vm413, %v410, %v402
    %v421 = vsel %vm413, %v412, %v404
    %v422 = vsel %vm192, %v414, 0.0
    %v423 = vsel %vm193, %v418, 0.0
    %v424 = vsel %vm192, %v415, 0.0
    %v425 = vsel %vm193, %v419, 0.0
    %v426 = vsel %vm192, %v416, 0.0
    %v427 = vsel %vm193, %v420, 0.0
    %v428 = vsel %vm192, %v417, 0.0
    %v429 = vsel %vm193, %v421, 0.0
    %s430 = scalar_lea.vmem [#allocation2], 64
    %v431 = vld [vmem:[%s430] sm:$0xff]
    %v432 = vld [vmem:[%s430 + $0x8] sm:$0xff]
    %v433 = vld [vmem:[%s430 + $0x10] sm:$0xff]
    %v434 = vld [vmem:[%s430 + $0x18] sm:$0xff]
    %v436 = vsel %vm256, %v431, 0
    %v439 = vsel %vm256, %v432, 0
    %v442 = vsel %vm256, %v433, 0
    %v445 = vsel %vm256, %v434, 0
    %447 = vmatpush.msra.mxu0 0.0
    %448 = vmatpush.msra.mxu0 0.0
    %449 = vmatpush.msra.mxu0 0.0
    %450 = vmatpush.msra.mxu0 0.0
    %451 = vmatpush.msra.mxu0 0.0
    %452 = vmatpush.msra.mxu0 0.0
    %453 = vmatpush.msra.mxu0 0.0
    %454 = vmatpush.msra.mxu0 0.0
    %455 = vmatpush.msra.mxu0 0.0
    %456 = vmatpush.msra.mxu0 0.0
    %457 = vmatpush.msra.mxu0 0.0
    %458 = vmatpush.msra.mxu0 0.0
    %459 = vmatpush.msra.mxu0 %v428
    %460 = vmatpush.msra.mxu0 %v426
    %461 = vmatpush.msra.mxu0 %v424
    %462 = vmatpush.msra.mxu0 %v422
    %463 = vmatmul.f32.gmra.mxu0 %v436
    %v464 = vpop.f32.mrf.mxu0
    %v465 = vadd.f32 0.0, %v464
    %466 = vmatmul.f32.gmra.mxu0 %v439
    %v467 = vpop.f32.mrf.mxu0
    %v468 = vadd.f32 0.0, %v467
    %469 = vmatmul.f32.gmra.mxu0 %v442
    %v470 = vpop.f32.mrf.mxu0
    %v471 = vadd.f32 0.0, %v470
    %472 = vmatmul.f32.gmra.mxu0 %v445
    %v473 = vpop.f32.mrf.mxu0
    %v474 = vadd.f32 0.0, %v473
    %475 = vdwg.mxu0
    %476 = vmatpush.msra.mxu0 0.0
    %477 = vmatpush.msra.mxu0 0.0
    %478 = vmatpush.msra.mxu0 0.0
    %479 = vmatpush.msra.mxu0 0.0
    %480 = vmatpush.msra.mxu0 0.0
    %481 = vmatpush.msra.mxu0 0.0
    %482 = vmatpush.msra.mxu0 0.0
    %483 = vmatpush.msra.mxu0 0.0
    %484 = vmatpush.msra.mxu0 0.0
    %485 = vmatpush.msra.mxu0 0.0
    %486 = vmatpush.msra.mxu0 0.0
    %487 = vmatpush.msra.mxu0 0.0
    %488 = vmatpush.msra.mxu0 %v429
    %489 = vmatpush.msra.mxu0 %v427
    %490 = vmatpush.msra.mxu0 %v425
    %491 = vmatpush.msra.mxu0 %v423
    %492 = vmatmul.f32.gmra.mxu0 %v436
    %v493 = vpop.f32.mrf.mxu0
    %v494 = vadd.f32 0.0, %v493
    %495 = vmatmul.f32.gmra.mxu0 %v439
    %v496 = vpop.f32.mrf.mxu0
    %v497 = vadd.f32 0.0, %v496
    %498 = vmatmul.f32.gmra.mxu0 %v442
    %v499 = vpop.f32.mrf.mxu0
    %v500 = vadd.f32 0.0, %v499
    %501 = vmatmul.f32.gmra.mxu0 %v445
    %v502 = vpop.f32.mrf.mxu0
    %v503 = vadd.f32 0.0, %v502
    %504 = vdwg.mxu0
    %v505 = vadd.f32 %v357, %v465
    %v506 = vadd.f32 %v386, %v494
    %v507 = vadd.f32 %v360, %v468
    %v508 = vadd.f32 %v389, %v497
    %v509 = vadd.f32 %v363, %v471
    %v510 = vadd.f32 %v392, %v500
    %v511 = vadd.f32 %v366, %v474
    %v512 = vadd.f32 %v395, %v503
    %v513 = vld [vmem:[%s3] sm:$0xff]
    %v514 = vld [vmem:[%s3 + $0x8] sm:$0xff]
    %v515 = vld [vmem:[%s3 + $0x10] sm:$0xff]
    %v516 = vld [vmem:[%s3 + $0x18] sm:$0xff]
    %518 = vset.pattern.permute.xlu0 0
    %519 = vperm.xlu0 %518, %v513
    %v520 = vpop.permute.xlu0 %519
    %523 = vset.pattern.permute.xlu0 0
    %524 = vperm.xlu0 %523, %v514
    %v525 = vpop.permute.xlu0 %524
    %528 = vset.pattern.permute.xlu0 0
    %529 = vperm.xlu0 %528, %v515
    %v530 = vpop.permute.xlu0 %529
    %533 = vset.pattern.permute.xlu0 0
    %534 = vperm.xlu0 %533, %v516
    %v535 = vpop.permute.xlu0 %534
    %v537 = vadd.f32 %v505, %v520
    %v538 = vadd.f32 %v506, %v520
    %v539 = vadd.f32 %v507, %v525
    %v540 = vadd.f32 %v508, %v525
    %v541 = vadd.f32 %v509, %v530
    %v542 = vadd.f32 %v510, %v530
    %v543 = vadd.f32 %v511, %v535
    %v544 = vadd.f32 %v512, %v535
    %v545 = vmul.f32 %v537, 0.01
    %v546 = vmul.f32 %v538, 0.01
    %v547 = vmul.f32 %v539, 0.01
    %v548 = vmul.f32 %v540, 0.01
    %v549 = vmul.f32 %v541, 0.01
    %v550 = vmul.f32 %v542, 0.01
    %v551 = vmul.f32 %v543, 0.01
    %v552 = vmul.f32 %v544, 0.01
    %v553 = vmax.f32 %v537, %v545
    %v554 = vmax.f32 %v538, %v546
    %v555 = vmax.f32 %v539, %v547
    %v556 = vmax.f32 %v540, %v548
    %v557 = vmax.f32 %v541, %v549
    %v558 = vmax.f32 %v542, %v550
    %v559 = vmax.f32 %v543, %v551
    %v560 = vmax.f32 %v544, %v552
    %v561 = vadd.f32 %v139, %v553
    %v562 = vadd.f32 %v158, %v554
    %v563 = vadd.f32 %v141, %v555
    %v564 = vadd.f32 %v160, %v556
    %v565 = vadd.f32 %v144, %v557
    %v566 = vadd.f32 %v163, %v558
    %v567 = vadd.f32 %v146, %v559
    %v568 = vadd.f32 %v165, %v560
    %569 = vrot.lane.b32.xlu0 %v561, 1
    %v570 = vpop.permute.xlu0 %569
    %571 = vrot.lane.b32.xlu0 %v563, 1
    %v572 = vpop.permute.xlu0 %571
    %573 = vrot.lane.b32.xlu0 %v565, 1
    %v574 = vpop.permute.xlu0 %573
    %575 = vrot.lane.b32.xlu0 %v567, 1
    %v576 = vpop.permute.xlu0 %575
    %577 = vrot.lane.b32.xlu0 %v562, 1
    %v578 = vpop.permute.xlu0 %577
    %579 = vrot.lane.b32.xlu0 %v564, 1
    %v580 = vpop.permute.xlu0 %579
    %581 = vrot.lane.b32.xlu0 %v566, 1
    %v582 = vpop.permute.xlu0 %581
    %583 = vrot.lane.b32.xlu0 %v568, 1
    %v584 = vpop.permute.xlu0 %583
    %v585 = vsel %vm222, %v570, %v578
    %v586 = vsel %vm222, %v572, %v580
    %v587 = vsel %vm222, %v574, %v582
    %v588 = vsel %vm222, %v576, %v584
    %v589 = vsel %vm222, %v578, %v570
    %v590 = vsel %vm222, %v580, %v572
    %v591 = vsel %vm222, %v582, %v574
    %v592 = vsel %vm222, %v584, %v576
    %v593 = vsel %vm178, %v589, 0.0
    %v594 = vsel %vm179, %v585, 0.0
    %v595 = vsel %vm178, %v590, 0.0
    %v596 = vsel %vm179, %v586, 0.0
    %v597 = vsel %vm178, %v591, 0.0
    %v598 = vsel %vm179, %v587, 0.0
    %v599 = vsel %vm178, %v592, 0.0
    %v600 = vsel %vm179, %v588, 0.0
    %s601 = scalar_lea.vmem [#allocation2], 96
    %v602 = vld [vmem:[%s601] sm:$0xff]
    %v603 = vld [vmem:[%s601 + $0x8] sm:$0xff]
    %v604 = vld [vmem:[%s601 + $0x10] sm:$0xff]
    %v605 = vld [vmem:[%s601 + $0x18] sm:$0xff]
    %v606 = vsel %vm184, %v561, 0.0
    %v607 = vsel %vm185, %v562, 0.0
    %v608 = vsel %vm184, %v563, 0.0
    %v609 = vsel %vm185, %v564, 0.0
    %v610 = vsel %vm184, %v565, 0.0
    %v611 = vsel %vm185, %v566, 0.0
    %v612 = vsel %vm184, %v567, 0.0
    %v613 = vsel %vm185, %v568, 0.0
    %s614 = scalar_lea.vmem [#allocation2], 128
    %v615 = vld [vmem:[%s614] sm:$0xff]
    %v616 = vld [vmem:[%s614 + $0x8] sm:$0xff]
    %v617 = vld [vmem:[%s614 + $0x10] sm:$0xff]
    %v618 = vld [vmem:[%s614 + $0x18] sm:$0xff]
    %v620 = vsel %vm256, %v615, 0
    %v623 = vsel %vm256, %v616, 0
    %v626 = vsel %vm256, %v617, 0
    %v629 = vsel %vm256, %v618, 0
    %631 = vmatpush.msra.mxu0 0.0
    %632 = vmatpush.msra.mxu0 0.0
    %633 = vmatpush.msra.mxu0 0.0
    %634 = vmatpush.msra.mxu0 0.0
    %635 = vmatpush.msra.mxu0 0.0
    %636 = vmatpush.msra.mxu0 0.0
    %637 = vmatpush.msra.mxu0 0.0
    %638 = vmatpush.msra.mxu0 0.0
    %639 = vmatpush.msra.mxu0 0.0
    %640 = vmatpush.msra.mxu0 0.0
    %641 = vmatpush.msra.mxu0 0.0
    %642 = vmatpush.msra.mxu0 0.0
    %643 = vmatpush.msra.mxu0 %v612
    %644 = vmatpush.msra.mxu0 %v610
    %645 = vmatpush.msra.mxu0 %v608
    %646 = vmatpush.msra.mxu0 %v606
    %647 = vmatmul.f32.gmra.mxu0 %v620
    %v648 = vpop.f32.mrf.mxu0
    %v649 = vadd.f32 0.0, %v648
    %650 = vmatmul.f32.gmra.mxu0 %v623
    %v651 = vpop.f32.mrf.mxu0
    %v652 = vadd.f32 0.0, %v651
    %653 = vmatmul.f32.gmra.mxu0 %v626
    %v654 = vpop.f32.mrf.mxu0
    %v655 = vadd.f32 0.0, %v654
    %656 = vmatmul.f32.gmra.mxu0 %v629
    %v657 = vpop.f32.mrf.mxu0
    %v658 = vadd.f32 0.0, %v657
    %659 = vdwg.mxu0
    %660 = vmatpush.msra.mxu0 0.0
    %661 = vmatpush.msra.mxu0 0.0
    %662 = vmatpush.msra.mxu0 0.0
    %663 = vmatpush.msra.mxu0 0.0
    %664 = vmatpush.msra.mxu0 0.0
    %665 = vmatpush.msra.mxu0 0.0
    %666 = vmatpush.msra.mxu0 0.0
    %667 = vmatpush.msra.mxu0 0.0
    %668 = vmatpush.msra.mxu0 0.0
    %669 = vmatpush.msra.mxu0 0.0
    %670 = vmatpush.msra.mxu0 0.0
    %671 = vmatpush.msra.mxu0 0.0
    %672 = vmatpush.msra.mxu0 %v613
    %673 = vmatpush.msra.mxu0 %v611
    %674 = vmatpush.msra.mxu0 %v609
    %675 = vmatpush.msra.mxu0 %v607
    %676 = vmatmul.f32.gmra.mxu0 %v620
    %v677 = vpop.f32.mrf.mxu0
    %v678 = vadd.f32 0.0, %v677
    %679 = vmatmul.f32.gmra.mxu0 %v623
    %v680 = vpop.f32.mrf.mxu0
    %v681 = vadd.f32 0.0, %v680
    %682 = vmatmul.f32.gmra.mxu0 %v626
    %v683 = vpop.f32.mrf.mxu0
    %v684 = vadd.f32 0.0, %v683
    %685 = vmatmul.f32.gmra.mxu0 %v629
    %v686 = vpop.f32.mrf.mxu0
    %v687 = vadd.f32 0.0, %v686
    %688 = vdwg.mxu0
    %v690 = vsel %vm256, %v602, 0
    %v693 = vsel %vm256, %v603, 0
    %v696 = vsel %vm256, %v604, 0
    %v699 = vsel %vm256, %v605, 0
    %701 = vmatpush.msra.mxu0 0.0
    %702 = vmatpush.msra.mxu0 0.0
    %703 = vmatpush.msra.mxu0 0.0
    %704 = vmatpush.msra.mxu0 0.0
    %705 = vmatpush.msra.mxu0 0.0
    %706 = vmatpush.msra.mxu0 0.0
    %707 = vmatpush.msra.mxu0 0.0
    %708 = vmatpush.msra.mxu0 0.0
    %709 = vmatpush.msra.mxu0 0.0
    %710 = vmatpush.msra.mxu0 0.0
    %711 = vmatpush.msra.mxu0 0.0
    %712 = vmatpush.msra.mxu0 0.0
    %713 = vmatpush.msra.mxu0 %v599
    %714 = vmatpush.msra.mxu0 %v597
    %715 = vmatpush.msra.mxu0 %v595
    %716 = vmatpush.msra.mxu0 %v593
    %717 = vmatmul.f32.gmra.mxu0 %v690
    %v718 = vpop.f32.mrf.mxu0
    %v719 = vadd.f32 %v649, %v718
    %720 = vmatmul.f32.gmra.mxu0 %v693
    %v721 = vpop.f32.mrf.mxu0
    %v722 = vadd.f32 %v652, %v721
    %723 = vmatmul.f32.gmra.mxu0 %v696
    %v724 = vpop.f32.mrf.mxu0
    %v725 = vadd.f32 %v655, %v724
    %726 = vmatmul.f32.gmra.mxu0 %v699
    %v727 = vpop.f32.mrf.mxu0
    %v728 = vadd.f32 %v658, %v727
    %729 = vdwg.mxu0
    %730 = vmatpush.msra.mxu0 0.0
    %731 = vmatpush.msra.mxu0 0.0
    %732 = vmatpush.msra.mxu0 0.0
    %733 = vmatpush.msra.mxu0 0.0
    %734 = vmatpush.msra.mxu0 0.0
    %735 = vmatpush.msra.mxu0 0.0
    %736 = vmatpush.msra.mxu0 0.0
    %737 = vmatpush.msra.mxu0 0.0
    %738 = vmatpush.msra.mxu0 0.0
    %739 = vmatpush.msra.mxu0 0.0
    %740 = vmatpush.msra.mxu0 0.0
    %741 = vmatpush.msra.mxu0 0.0
    %742 = vmatpush.msra.mxu0 %v600
    %743 = vmatpush.msra.mxu0 %v598
    %744 = vmatpush.msra.mxu0 %v596
    %745 = vmatpush.msra.mxu0 %v594
    %746 = vmatmul.f32.gmra.mxu0 %v690
    %v747 = vpop.f32.mrf.mxu0
    %v748 = vadd.f32 %v678, %v747
    %749 = vmatmul.f32.gmra.mxu0 %v693
    %v750 = vpop.f32.mrf.mxu0
    %v751 = vadd.f32 %v681, %v750
    %752 = vmatmul.f32.gmra.mxu0 %v696
    %v753 = vpop.f32.mrf.mxu0
    %v754 = vadd.f32 %v684, %v753
    %755 = vmatmul.f32.gmra.mxu0 %v699
    %v756 = vpop.f32.mrf.mxu0
    %v757 = vadd.f32 %v687, %v756
    %758 = vdwg.mxu0
    %759 = vrot.lane.b32.xlu0 %v561, 127
    %v760 = vpop.permute.xlu0 %759
    %761 = vrot.lane.b32.xlu0 %v563, 127
    %v762 = vpop.permute.xlu0 %761
    %763 = vrot.lane.b32.xlu0 %v565, 127
    %v764 = vpop.permute.xlu0 %763
    %765 = vrot.lane.b32.xlu0 %v567, 127
    %v766 = vpop.permute.xlu0 %765
    %767 = vrot.lane.b32.xlu0 %v562, 127
    %v768 = vpop.permute.xlu0 %767
    %769 = vrot.lane.b32.xlu0 %v564, 127
    %v770 = vpop.permute.xlu0 %769
    %771 = vrot.lane.b32.xlu0 %v566, 127
    %v772 = vpop.permute.xlu0 %771
    %773 = vrot.lane.b32.xlu0 %v568, 127
    %v774 = vpop.permute.xlu0 %773
    %v775 = vsel %vm413, %v760, %v768
    %v776 = vsel %vm413, %v762, %v770
    %v777 = vsel %vm413, %v764, %v772
    %v778 = vsel %vm413, %v766, %v774
    %v779 = vsel %vm413, %v768, %v760
    %v780 = vsel %vm413, %v770, %v762
    %v781 = vsel %vm413, %v772, %v764
    %v782 = vsel %vm413, %v774, %v766
    %v783 = vsel %vm192, %v775, 0.0
    %v784 = vsel %vm193, %v779, 0.0
    %v785 = vsel %vm192, %v776, 0.0
    %v786 = vsel %vm193, %v780, 0.0
    %v787 = vsel %vm192, %v777, 0.0
    %v788 = vsel %vm193, %v781, 0.0
    %v789 = vsel %vm192, %v778, 0.0
    %v790 = vsel %vm193, %v782, 0.0
    %s791 = scalar_lea.vmem [#allocation2], 160
    %v792 = vld [vmem:[%s791] sm:$0xff]
    %v793 = vld [vmem:[%s791 + $0x8] sm:$0xff]
    %v794 = vld [vmem:[%s791 + $0x10] sm:$0xff]
    %v795 = vld [vmem:[%s791 + $0x18] sm:$0xff]
    %v797 = vsel %vm256, %v792, 0
    %v800 = vsel %vm256, %v793, 0
    %v803 = vsel %vm256, %v794, 0
    %v806 = vsel %vm256, %v795, 0
    %808 = vmatpush.msra.mxu0 0.0
    %809 = vmatpush.msra.mxu0 0.0
    %810 = vmatpush.msra.mxu0 0.0
    %811 = vmatpush.msra.mxu0 0.0
    %812 = vmatpush.msra.mxu0 0.0
    %813 = vmatpush.msra.mxu0 0.0
    %814 = vmatpush.msra.mxu0 0.0
    %815 = vmatpush.msra.mxu0 0.0
    %816 = vmatpush.msra.mxu0 0.0
    %817 = vmatpush.msra.mxu0 0.0
    %818 = vmatpush.msra.mxu0 0.0
    %819 = vmatpush.msra.mxu0 0.0
    %820 = vmatpush.msra.mxu0 %v789
    %821 = vmatpush.msra.mxu0 %v787
    %822 = vmatpush.msra.mxu0 %v785
    %823 = vmatpush.msra.mxu0 %v783
    %824 = vmatmul.f32.gmra.mxu0 %v797
    %v825 = vpop.f32.mrf.mxu0
    %v826 = vadd.f32 0.0, %v825
    %827 = vmatmul.f32.gmra.mxu0 %v800
    %v828 = vpop.f32.mrf.mxu0
    %v829 = vadd.f32 0.0, %v828
    %830 = vmatmul.f32.gmra.mxu0 %v803
    %v831 = vpop.f32.mrf.mxu0
    %v832 = vadd.f32 0.0, %v831
    %833 = vmatmul.f32.gmra.mxu0 %v806
    %v834 = vpop.f32.mrf.mxu0
    %v835 = vadd.f32 0.0, %v834
    %836 = vdwg.mxu0
    %837 = vmatpush.msra.mxu0 0.0
    %838 = vmatpush.msra.mxu0 0.0
    %839 = vmatpush.msra.mxu0 0.0
    %840 = vmatpush.msra.mxu0 0.0
    %841 = vmatpush.msra.mxu0 0.0
    %842 = vmatpush.msra.mxu0 0.0
    %843 = vmatpush.msra.mxu0 0.0
    %844 = vmatpush.msra.mxu0 0.0
    %845 = vmatpush.msra.mxu0 0.0
    %846 = vmatpush.msra.mxu0 0.0
    %847 = vmatpush.msra.mxu0 0.0
    %848 = vmatpush.msra.mxu0 0.0
    %849 = vmatpush.msra.mxu0 %v790
    %850 = vmatpush.msra.mxu0 %v788
    %851 = vmatpush.msra.mxu0 %v786
    %852 = vmatpush.msra.mxu0 %v784
    %853 = vmatmul.f32.gmra.mxu0 %v797
    %v854 = vpop.f32.mrf.mxu0
    %v855 = vadd.f32 0.0, %v854
    %856 = vmatmul.f32.gmra.mxu0 %v800
    %v857 = vpop.f32.mrf.mxu0
    %v858 = vadd.f32 0.0, %v857
    %859 = vmatmul.f32.gmra.mxu0 %v803
    %v860 = vpop.f32.mrf.mxu0
    %v861 = vadd.f32 0.0, %v860
    %862 = vmatmul.f32.gmra.mxu0 %v806
    %v863 = vpop.f32.mrf.mxu0
    %v864 = vadd.f32 0.0, %v863
    %865 = vdwg.mxu0
    %v866 = vadd.f32 %v719, %v826
    %v867 = vadd.f32 %v748, %v855
    %v868 = vadd.f32 %v722, %v829
    %v869 = vadd.f32 %v751, %v858
    %v870 = vadd.f32 %v725, %v832
    %v871 = vadd.f32 %v754, %v861
    %v872 = vadd.f32 %v728, %v835
    %v873 = vadd.f32 %v757, %v864
    %s874 = scalar_lea.vmem %s3, 32
    %v875 = vld [vmem:[%s874] sm:$0xff]
    %v876 = vld [vmem:[%s874 + $0x8] sm:$0xff]
    %v877 = vld [vmem:[%s874 + $0x10] sm:$0xff]
    %v878 = vld [vmem:[%s874 + $0x18] sm:$0xff]
    %880 = vset.pattern.permute.xlu0 0
    %881 = vperm.xlu0 %880, %v875
    %v882 = vpop.permute.xlu0 %881
    %885 = vset.pattern.permute.xlu0 0
    %886 = vperm.xlu0 %885, %v876
    %v887 = vpop.permute.xlu0 %886
    %890 = vset.pattern.permute.xlu0 0
    %891 = vperm.xlu0 %890, %v877
    %v892 = vpop.permute.xlu0 %891
    %895 = vset.pattern.permute.xlu0 0
    %896 = vperm.xlu0 %895, %v878
    %v897 = vpop.permute.xlu0 %896
    %v899 = vadd.f32 %v866, %v882
    %v900 = vadd.f32 %v867, %v882
    %v901 = vadd.f32 %v868, %v887
    %v902 = vadd.f32 %v869, %v887
    %v903 = vadd.f32 %v870, %v892
    %v904 = vadd.f32 %v871, %v892
    %v905 = vadd.f32 %v872, %v897
    %v906 = vadd.f32 %v873, %v897
    %v907 = vmul.f32 %v899, 0.01
    %v908 = vmul.f32 %v900, 0.01
    %v909 = vmul.f32 %v901, 0.01
    %v910 = vmul.f32 %v902, 0.01
    %v911 = vmul.f32 %v903, 0.01
    %v912 = vmul.f32 %v904, 0.01
    %v913 = vmul.f32 %v905, 0.01
    %v914 = vmul.f32 %v906, 0.01
    %v915 = vmax.f32 %v899, %v907
    %v916 = vmax.f32 %v900, %v908
    %v917 = vmax.f32 %v901, %v909
    %v918 = vmax.f32 %v902, %v910
    %v919 = vmax.f32 %v903, %v911
    %v920 = vmax.f32 %v904, %v912
    %v921 = vmax.f32 %v905, %v913
    %v922 = vmax.f32 %v906, %v914
    %v923 = vadd.f32 %v561, %v915
    %v924 = vadd.f32 %v562, %v916
    %v925 = vadd.f32 %v563, %v917
    %v926 = vadd.f32 %v564, %v918
    %v927 = vadd.f32 %v565, %v919
    %v928 = vadd.f32 %v566, %v920
    %v929 = vadd.f32 %v567, %v921
    %v930 = vadd.f32 %v568, %v922
    %931 = vrot.lane.b32.xlu0 %v923, 127
    %v932 = vpop.permute.xlu0 %931
    %933 = vrot.lane.b32.xlu0 %v925, 127
    %v934 = vpop.permute.xlu0 %933
    %935 = vrot.lane.b32.xlu0 %v927, 127
    %v936 = vpop.permute.xlu0 %935
    %937 = vrot.lane.b32.xlu0 %v929, 127
    %v938 = vpop.permute.xlu0 %937
    %939 = vrot.lane.b32.xlu0 %v924, 127
    %v940 = vpop.permute.xlu0 %939
    %941 = vrot.lane.b32.xlu0 %v926, 127
    %v942 = vpop.permute.xlu0 %941
    %943 = vrot.lane.b32.xlu0 %v928, 127
    %v944 = vpop.permute.xlu0 %943
    %945 = vrot.lane.b32.xlu0 %v930, 127
    %v946 = vpop.permute.xlu0 %945
    %v947 = vsel %vm413, %v932, %v940
    %v948 = vsel %vm413, %v934, %v942
    %v949 = vsel %vm413, %v936, %v944
    %v950 = vsel %vm413, %v938, %v946
    %v951 = vsel %vm413, %v940, %v932
    %v952 = vsel %vm413, %v942, %v934
    %v953 = vsel %vm413, %v944, %v936
    %v954 = vsel %vm413, %v946, %v938
    %955 = vrot.lane.b32.xlu0 %v923, 15
    %v956 = vpop.permute.xlu0 %955
    %957 = vrot.lane.b32.xlu0 %v925, 15
    %v958 = vpop.permute.xlu0 %957
    %959 = vrot.lane.b32.xlu0 %v927, 15
    %v960 = vpop.permute.xlu0 %959
    %961 = vrot.lane.b32.xlu0 %v929, 15
    %v962 = vpop.permute.xlu0 %961
    %963 = vrot.lane.b32.xlu0 %v924, 15
    %v964 = vpop.permute.xlu0 %963
    %965 = vrot.lane.b32.xlu0 %v926, 15
    %v966 = vpop.permute.xlu0 %965
    %967 = vrot.lane.b32.xlu0 %v928, 15
    %v968 = vpop.permute.xlu0 %967
    %969 = vrot.lane.b32.xlu0 %v930, 15
    %v970 = vpop.permute.xlu0 %969
    %vm971 = vcmp.lt.s32.totalorder %v168, 15
    %v972 = vsel %vm971, %v956, %v964
    %v973 = vsel %vm971, %v958, %v966
    %v974 = vsel %vm971, %v960, %v968
    %v975 = vsel %vm971, %v962, %v970
    %v976 = vsel %vm971, %v964, %v956
    %v977 = vsel %vm971, %v966, %v958
    %v978 = vsel %vm971, %v968, %v960
    %v979 = vsel %vm971, %v970, %v962
    %v980 = vsel %vm190, %v947, %v976
    %v981 = vsel %vm191, %v951, %v972
    %v982 = vsel %vm190, %v948, %v977
    %v983 = vsel %vm191, %v952, %v973
    %v984 = vsel %vm190, %v949, %v978
    %v985 = vsel %vm191, %v953, %v974
    %v986 = vsel %vm190, %v950, %v979
    %v987 = vsel %vm191, %v954, %v975
    %v988 = vmax.f32 %v923, %v980
    %v989 = vmax.f32 %v924, %v981
    %v990 = vmax.f32 %v925, %v982
    %v991 = vmax.f32 %v926, %v983
    %v992 = vmax.f32 %v927, %v984
    %v993 = vmax.f32 %v928, %v985
    %v994 = vmax.f32 %v929, %v986
    %v995 = vmax.f32 %v930, %v987
    %996 = vrot.lane.b32.xlu0 %v988, 126
    %v997 = vpop.permute.xlu0 %996
    %998 = vrot.lane.b32.xlu0 %v990, 126
    %v999 = vpop.permute.xlu0 %998
    %1000 = vrot.lane.b32.xlu0 %v992, 126
    %v1001 = vpop.permute.xlu0 %1000
    %1002 = vrot.lane.b32.xlu0 %v994, 126
    %v1003 = vpop.permute.xlu0 %1002
    %1004 = vrot.lane.b32.xlu0 %v989, 126
    %v1005 = vpop.permute.xlu0 %1004
    %1006 = vrot.lane.b32.xlu0 %v991, 126
    %v1007 = vpop.permute.xlu0 %1006
    %1008 = vrot.lane.b32.xlu0 %v993, 126
    %v1009 = vpop.permute.xlu0 %1008
    %1010 = vrot.lane.b32.xlu0 %v995, 126
    %v1011 = vpop.permute.xlu0 %1010
    %vm1012 = vcmp.lt.s32.totalorder %v168, 126
    %v1013 = vsel %vm1012, %v997, %v1005
    %v1014 = vsel %vm1012, %v999, %v1007
    %v1015 = vsel %vm1012, %v1001, %v1009
    %v1016 = vsel %vm1012, %v1003, %v1011
    %v1017 = vsel %vm1012, %v1005, %v997
    %v1018 = vsel %vm1012, %v1007, %v999
    %v1019 = vsel %vm1012, %v1009, %v1001
    %v1020 = vsel %vm1012, %v1011, %v1003
    %1021 = vrot.lane.b32.xlu0 %v988, 14
    %v1022 = vpop.permute.xlu0 %1021
    %1023 = vrot.lane.b32.xlu0 %v990, 14
    %v1024 = vpop.permute.xlu0 %1023
    %1025 = vrot.lane.b32.xlu0 %v992, 14
    %v1026 = vpop.permute.xlu0 %1025
    %1027 = vrot.lane.b32.xlu0 %v994, 14
    %v1028 = vpop.permute.xlu0 %1027
    %1029 = vrot.lane.b32.xlu0 %v989, 14
    %v1030 = vpop.permute.xlu0 %1029
    %1031 = vrot.lane.b32.xlu0 %v991, 14
    %v1032 = vpop.permute.xlu0 %1031
    %1033 = vrot.lane.b32.xlu0 %v993, 14
    %v1034 = vpop.permute.xlu0 %1033
    %1035 = vrot.lane.b32.xlu0 %v995, 14
    %v1036 = vpop.permute.xlu0 %1035
    %vm1037 = vcmp.lt.s32.totalorder %v168, 14
    %v1038 = vsel %vm1037, %v1022, %v1030
    %v1039 = vsel %vm1037, %v1024, %v1032
    %v1040 = vsel %vm1037, %v1026, %v1034
    %v1041 = vsel %vm1037, %v1028, %v1036
    %v1042 = vsel %vm1037, %v1030, %v1022
    %v1043 = vsel %vm1037, %v1032, %v1024
    %v1044 = vsel %vm1037, %v1034, %v1026
    %v1045 = vsel %vm1037, %v1036, %v1028
    %v1046 = vsel %vm196, %v1013, %v1042
    %v1047 = vsel %vm197, %v1017, %v1038
    %v1048 = vsel %vm196, %v1014, %v1043
    %v1049 = vsel %vm197, %v1018, %v1039
    %v1050 = vsel %vm196, %v1015, %v1044
    %v1051 = vsel %vm197, %v1019, %v1040
    %v1052 = vsel %vm196, %v1016, %v1045
    %v1053 = vsel %vm197, %v1020, %v1041
    %v1054 = vmax.f32 %v988, %v1046
    %v1055 = vmax.f32 %v989, %v1047
    %v1056 = vmax.f32 %v990, %v1048
    %v1057 = vmax.f32 %v991, %v1049
    %v1058 = vmax.f32 %v992, %v1050
    %v1059 = vmax.f32 %v993, %v1051
    %v1060 = vmax.f32 %v994, %v1052
    %v1061 = vmax.f32 %v995, %v1053
    %1062 = vrot.lane.b32.xlu0 %v1054, 124
    %v1063 = vpop.permute.xlu0 %1062
    %1064 = vrot.lane.b32.xlu0 %v1056, 124
    %v1065 = vpop.permute.xlu0 %1064
    %1066 = vrot.lane.b32.xlu0 %v1058, 124
    %v1067 = vpop.permute.xlu0 %1066
    %1068 = vrot.lane.b32.xlu0 %v1060, 124
    %v1069 = vpop.permute.xlu0 %1068
    %1070 = vrot.lane.b32.xlu0 %v1055, 124
    %v1071 = vpop.permute.xlu0 %1070
    %1072 = vrot.lane.b32.xlu0 %v1057, 124
    %v1073 = vpop.permute.xlu0 %1072
    %1074 = vrot.lane.b32.xlu0 %v1059, 124
    %v1075 = vpop.permute.xlu0 %1074
    %1076 = vrot.lane.b32.xlu0 %v1061, 124
    %v1077 = vpop.permute.xlu0 %1076
    %vm1078 = vcmp.lt.s32.totalorder %v168, 124
    %v1079 = vsel %vm1078, %v1063, %v1071
    %v1080 = vsel %vm1078, %v1065, %v1073
    %v1081 = vsel %vm1078, %v1067, %v1075
    %v1082 = vsel %vm1078, %v1069, %v1077
    %v1083 = vsel %vm1078, %v1071, %v1063
    %v1084 = vsel %vm1078, %v1073, %v1065
    %v1085 = vsel %vm1078, %v1075, %v1067
    %v1086 = vsel %vm1078, %v1077, %v1069
    %1087 = vrot.lane.b32.xlu0 %v1054, 12
    %v1088 = vpop.permute.xlu0 %1087
    %1089 = vrot.lane.b32.xlu0 %v1056, 12
    %v1090 = vpop.permute.xlu0 %1089
    %1091 = vrot.lane.b32.xlu0 %v1058, 12
    %v1092 = vpop.permute.xlu0 %1091
    %1093 = vrot.lane.b32.xlu0 %v1060, 12
    %v1094 = vpop.permute.xlu0 %1093
    %1095 = vrot.lane.b32.xlu0 %v1055, 12
    %v1096 = vpop.permute.xlu0 %1095
    %1097 = vrot.lane.b32.xlu0 %v1057, 12
    %v1098 = vpop.permute.xlu0 %1097
    %1099 = vrot.lane.b32.xlu0 %v1059, 12
    %v1100 = vpop.permute.xlu0 %1099
    %1101 = vrot.lane.b32.xlu0 %v1061, 12
    %v1102 = vpop.permute.xlu0 %1101
    %vm1103 = vcmp.lt.s32.totalorder %v168, 12
    %v1104 = vsel %vm1103, %v1088, %v1096
    %v1105 = vsel %vm1103, %v1090, %v1098
    %v1106 = vsel %vm1103, %v1092, %v1100
    %v1107 = vsel %vm1103, %v1094, %v1102
    %v1108 = vsel %vm1103, %v1096, %v1088
    %v1109 = vsel %vm1103, %v1098, %v1090
    %v1110 = vsel %vm1103, %v1100, %v1092
    %v1111 = vsel %vm1103, %v1102, %v1094
    %v1112 = vsel %vm200, %v1079, %v1108
    %v1113 = vsel %vm201, %v1083, %v1104
    %v1114 = vsel %vm200, %v1080, %v1109
    %v1115 = vsel %vm201, %v1084, %v1105
    %v1116 = vsel %vm200, %v1081, %v1110
    %v1117 = vsel %vm201, %v1085, %v1106
    %v1118 = vsel %vm200, %v1082, %v1111
    %v1119 = vsel %vm201, %v1086, %v1107
    %v1120 = vmax.f32 %v1054, %v1112
    %v1121 = vmax.f32 %v1055, %v1113
    %v1122 = vmax.f32 %v1056, %v1114
    %v1123 = vmax.f32 %v1057, %v1115
    %v1124 = vmax.f32 %v1058, %v1116
    %v1125 = vmax.f32 %v1059, %v1117
    %v1126 = vmax.f32 %v1060, %v1118
    %v1127 = vmax.f32 %v1061, %v1119
    %1128 = vrot.lane.b32.xlu0 %v1120, 120
    %v1129 = vpop.permute.xlu0 %1128
    %1130 = vrot.lane.b32.xlu0 %v1122, 120
    %v1131 = vpop.permute.xlu0 %1130
    %1132 = vrot.lane.b32.xlu0 %v1124, 120
    %v1133 = vpop.permute.xlu0 %1132
    %1134 = vrot.lane.b32.xlu0 %v1126, 120
    %v1135 = vpop.permute.xlu0 %1134
    %1136 = vrot.lane.b32.xlu0 %v1121, 120
    %v1137 = vpop.permute.xlu0 %1136
    %1138 = vrot.lane.b32.xlu0 %v1123, 120
    %v1139 = vpop.permute.xlu0 %1138
    %1140 = vrot.lane.b32.xlu0 %v1125, 120
    %v1141 = vpop.permute.xlu0 %1140
    %1142 = vrot.lane.b32.xlu0 %v1127, 120
    %v1143 = vpop.permute.xlu0 %1142
    %vm1144 = vcmp.lt.s32.totalorder %v168, 120
    %v1145 = vsel %vm1144, %v1129, %v1137
    %v1146 = vsel %vm1144, %v1131, %v1139
    %v1147 = vsel %vm1144, %v1133, %v1141
    %v1148 = vsel %vm1144, %v1135, %v1143
    %v1149 = vsel %vm1144, %v1137, %v1129
    %v1150 = vsel %vm1144, %v1139, %v1131
    %v1151 = vsel %vm1144, %v1141, %v1133
    %v1152 = vsel %vm1144, %v1143, %v1135
    %1153 = vrot.lane.b32.xlu0 %v1120, 8
    %v1154 = vpop.permute.xlu0 %1153
    %1155 = vrot.lane.b32.xlu0 %v1122, 8
    %v1156 = vpop.permute.xlu0 %1155
    %1157 = vrot.lane.b32.xlu0 %v1124, 8
    %v1158 = vpop.permute.xlu0 %1157
    %1159 = vrot.lane.b32.xlu0 %v1126, 8
    %v1160 = vpop.permute.xlu0 %1159
    %1161 = vrot.lane.b32.xlu0 %v1121, 8
    %v1162 = vpop.permute.xlu0 %1161
    %1163 = vrot.lane.b32.xlu0 %v1123, 8
    %v1164 = vpop.permute.xlu0 %1163
    %1165 = vrot.lane.b32.xlu0 %v1125, 8
    %v1166 = vpop.permute.xlu0 %1165
    %1167 = vrot.lane.b32.xlu0 %v1127, 8
    %v1168 = vpop.permute.xlu0 %1167
    %vm1169 = vcmp.lt.s32.totalorder %v168, 8
    %v1170 = vsel %vm1169, %v1154, %v1162
    %v1171 = vsel %vm1169, %v1156, %v1164
    %v1172 = vsel %vm1169, %v1158, %v1166
    %v1173 = vsel %vm1169, %v1160, %v1168
    %v1174 = vsel %vm1169, %v1162, %v1154
    %v1175 = vsel %vm1169, %v1164, %v1156
    %v1176 = vsel %vm1169, %v1166, %v1158
    %v1177 = vsel %vm1169, %v1168, %v1160
    %v1178 = vsel %vm204, %v1145, %v1174
    %v1179 = vsel %vm205, %v1149, %v1170
    %v1180 = vsel %vm204, %v1146, %v1175
    %v1181 = vsel %vm205, %v1150, %v1171
    %v1182 = vsel %vm204, %v1147, %v1176
    %v1183 = vsel %vm205, %v1151, %v1172
    %v1184 = vsel %vm204, %v1148, %v1177
    %v1185 = vsel %vm205, %v1152, %v1173
    %v1186 = vmax.f32 %v1120, %v1178
    %v1187 = vmax.f32 %v1121, %v1179
    %v1188 = vmax.f32 %v1122, %v1180
    %v1189 = vmax.f32 %v1123, %v1181
    %v1190 = vmax.f32 %v1124, %v1182
    %v1191 = vmax.f32 %v1125, %v1183
    %v1192 = vmax.f32 %v1126, %v1184
    %v1193 = vmax.f32 %v1127, %v1185
    %v1194 = vld [vmem:[%s4] sm:$0xff]
    %v1195 = vld [vmem:[%s4 + $0x8] sm:$0xff]
    %v1196 = vld [vmem:[%s5] sm:$0xff]
    %v1197 = vld [vmem:[%s5 + $0x8] sm:$0xff]
    %1199 = vset.pattern.permute.xlu0 0
    %1200 = vperm.xlu0 %1199, %v1196
    %v1201 = vpop.permute.xlu0 %1200
    %1204 = vset.pattern.permute.xlu0 0
    %1205 = vperm.xlu0 %1204, %v1197
    %v1206 = vpop.permute.xlu0 %1205
    %v1209 = vsel %vm256, %v1194, 0
    %v1212 = vsel %vm256, %v1195, 0
    %1214 = vmatpush.msra.mxu0 0.0
    %1215 = vmatpush.msra.mxu0 0.0
    %1216 = vmatpush.msra.mxu0 0.0
    %1217 = vmatpush.msra.mxu0 0.0
    %1218 = vmatpush.msra.mxu0 0.0
    %1219 = vmatpush.msra.mxu0 0.0
    %1220 = vmatpush.msra.mxu0 0.0
    %1221 = vmatpush.msra.mxu0 0.0
    %1222 = vmatpush.msra.mxu0 0.0
    %1223 = vmatpush.msra.mxu0 0.0
    %1224 = vmatpush.msra.mxu0 0.0
    %1225 = vmatpush.msra.mxu0 0.0
    %1226 = vmatpush.msra.mxu0 %v1192
    %1227 = vmatpush.msra.mxu0 %v1190
    %1228 = vmatpush.msra.mxu0 %v1188
    %1229 = vmatpush.msra.mxu0 %v1186
    %1230 = vmatmul.f32.gmra.mxu0 %v1209
    %v1231 = vpop.f32.mrf.mxu0
    %v1232 = vadd.f32 %v1201, %v1231
    %1233 = vmatmul.f32.gmra.mxu0 %v1212
    %v1234 = vpop.f32.mrf.mxu0
    %v1235 = vadd.f32 %v1206, %v1234
    %1236 = vdwg.mxu0
    %1237 = vmatpush.msra.mxu0 0.0
    %1238 = vmatpush.msra.mxu0 0.0
    %1239 = vmatpush.msra.mxu0 0.0
    %1240 = vmatpush.msra.mxu0 0.0
    %1241 = vmatpush.msra.mxu0 0.0
    %1242 = vmatpush.msra.mxu0 0.0
    %1243 = vmatpush.msra.mxu0 0.0
    %1244 = vmatpush.msra.mxu0 0.0
    %1245 = vmatpush.msra.mxu0 0.0
    %1246 = vmatpush.msra.mxu0 0.0
    %1247 = vmatpush.msra.mxu0 0.0
    %1248 = vmatpush.msra.mxu0 0.0
    %1249 = vmatpush.msra.mxu0 %v1193
    %1250 = vmatpush.msra.mxu0 %v1191
    %1251 = vmatpush.msra.mxu0 %v1189
    %1252 = vmatpush.msra.mxu0 %v1187
    %1253 = vmatmul.f32.gmra.mxu0 %v1209
    %v1254 = vpop.f32.mrf.mxu0
    %v1255 = vadd.f32 %v1201, %v1254
    %1256 = vmatmul.f32.gmra.mxu0 %v1212
    %v1257 = vpop.f32.mrf.mxu0
    %v1258 = vadd.f32 %v1206, %v1257
    %1259 = vdwg.mxu0
    %1260 = vst [vmem:[%s6] sm:$0xff] %v1232
    %1261 = vst [vmem:[%s6 + $0x8] sm:$0xff] %v1255
    %1262 = vst [vmem:[%s6 + $0x10] sm:$0xff] %v1235
    %1263 = vst [vmem:[%s6 + $0x18] sm:$0xff] %v1258
    // Predicated region
    $region30: #{single_token_pos_tagger.1} parent=1 // pred_check
      _
    $region31: #{single_token_pos_tagger.1} parent=1 // pred_check_branch
      %1265 = sbr.rel (0) target = $region33
    $region32: #{single_token_pos_tagger.1} parent=1 // pred_region
      _
    $region33: #{single_token_pos_tagger.1} parent=1 // pred_fallthru
      _
    // Predicated region
    $region34: #{single_token_pos_tagger.1} parent=1 // pred_check
      _
    $region35: #{single_token_pos_tagger.1} parent=1 // pred_check_branch
      %1267 = sbr.rel (0) target = $region37
    $region36: #{single_token_pos_tagger.1} parent=1 // pred_region
      _
    $region37: #{single_token_pos_tagger.1} parent=1 // pred_fallthru
      _
    %1268 = vsyncpa [#allocation3], 1

</llo_original>
